<compile_context>
chip_gen: v5e
topology: v5e:2x2
jax: 0.10.0
libtpu: 0.0.40
codegen_flags: <defaults>
</compile_context>

<pallas_src>
import jax
import jax.numpy as jnp
from jax.experimental import pallas as pl
from jax.experimental.pallas import tpu as pltpu


def _mhfa_kernel(wk_ref, wv_ref,            # SMEM (L,) f32: pre-softmaxed layer weights
                 x_ref,                      # VMEM (L, Bb, T, D): hidden-state block
                 wv_c_ref, bv_ref,           # (D, C), (1, C): value compression linear
                 wka_ref, bka_ref,           # (D, H), (1, H): Wk folded with att head
                 wp_ref, bp_ref,             # (H*C, O), (1, O): pooling FC
                 wcls_ref,                   # (O, NCp): L2-normalized, lane-padded classifier
                 out_ref):                   # (1, Bb, NCp) f32
    L, Bb, T, D = x_ref.shape
    C = wv_c_ref.shape[1]
    H = wka_ref.shape[1]
    M = Bb * T

    # ---- layer mix: single pass over L, D lane-minor, f32 accumulation ----
    x0 = x_ref[0].astype(jnp.float32)
    k = x0 * wk_ref[0]
    v = x0 * wv_ref[0]
    for l in range(1, L):
        xl = x_ref[l].astype(jnp.float32)
        k = k + xl * wk_ref[l]
        v = v + xl * wv_ref[l]
    kd = k.reshape(M, D).astype(wka_ref.dtype)
    vd = v.reshape(M, D).astype(wv_c_ref.dtype)

    # ---- attention logits: att_head(cmp_linear_k(k)) == k @ Wka + bka (Wa folded) ----
    att = jnp.dot(kd, wka_ref[...], preferred_element_type=jnp.float32) + bka_ref[...]
    # ---- value compression: v @ Wv.T + bv ----
    v_c = jnp.dot(vd, wv_c_ref[...], preferred_element_type=jnp.float32) + bv_ref[...]

    # ---- per-sample softmax over time (axis=1) ----
    att3 = att.reshape(Bb, T, H)
    m = jnp.max(att3, axis=1, keepdims=True)
    e = jnp.exp(att3 - m)
    denom = jnp.sum(e, axis=1, keepdims=True)
    att_s = e * pl.reciprocal(denom, approx=True)            # (Bb, T, H)

    # ---- pooled[b, h, c] = sum_t att_s[b, t, h] * v_c[b, t, c] ----
    pooled = jnp.einsum('bth,btc->bhc', att_s, v_c.reshape(Bb, T, C),
                        preferred_element_type=jnp.float32)   # (Bb, H, C)

    # ---- pooling FC: one (Bb, H*C) @ (H*C, O) contraction ----
    feat = jnp.dot(pooled.reshape(Bb, H * C).astype(wp_ref.dtype), wp_ref[...],
                   preferred_element_type=jnp.float32) + bp_ref[...]   # (Bb, O)

    # ---- AMSM cosine head (label=None): L2-normalize, project onto unit-norm weights ----
    ss = jnp.sum(feat * feat, axis=-1, keepdims=True)
    feat_n = feat * jax.lax.rsqrt(jnp.maximum(ss, 1e-24))
    out_ref[0] = jnp.dot(feat_n.astype(wcls_ref.dtype), wcls_ref[...],
                         preferred_element_type=jnp.float32)


def _round_up(x, m):
    return (x + m - 1) // m * m


def _block_footprint(bb, L, T, D, C, H, O, NCp, x_bytes, w_bytes):
    """Rough VMEM bytes for one grid step (input block, intermediates, weights, output)."""
    m = bb * T
    x_blk = 2 * L * bb * T * D * x_bytes            # double-buffered input block
    mix = 4 * m * D * 3                             # k, v f32 accumulators + slab slack
    mix += x_bytes * m * D * 2                      # kd, vd MXU-dtype copies
    small = 4 * m * (2 * C + 3 * H)                 # v_c, att, exp, att_s
    small += 4 * bb * (H * C + 2 * O + NCp)         # pooled, feat, feat_n, logits
    out_blk = 2 * bb * NCp * 4                      # double-buffered output block
    return x_blk + mix + small + out_blk + w_bytes


def _pick_batch_block(B, min_steps, budget, footprint_fn):
    """Largest divisor of B that fits the budget and keeps >= min_steps grid steps."""
    best = 1
    for bb in range(1, B + 1):
        if B % bb:
            continue
        if B // bb < min(B, min_steps):
            continue
        if footprint_fn(bb) <= budget:
            best = max(best, bb)
    return best


def mhfa_forward(hidden_states, params, batch_block=None, compute_dtype=jnp.bfloat16):
    """hidden_states: (L, B, T, D) float32; returns (B, num_classes) cosine logits."""
    L, B, T, D = hidden_states.shape
    C = params["Wk"].shape[0]
    H = params["Wa"].shape[0]
    O = params["Wp"].shape[0]
    NC = params["Wcls"].shape[0]
    NCp = _round_up(NC, 128)                 # lane-dense output store
    cdt = compute_dtype

    # -------- batch-independent parameter prep, hoisted out of the kernel --------
    wk = jax.nn.softmax(params["weights_k"]).astype(jnp.float32)        # (L,)
    wv = jax.nn.softmax(params["weights_v"]).astype(jnp.float32)        # (L,)
    # Fold the attention head into the k-compression:
    #   (k @ Wk.T + bk) @ Wa.T + ba == k @ (Wk.T @ Wa.T) + (bk @ Wa.T + ba)
    wka = (params["Wk"].T @ params["Wa"].T).astype(cdt)                 # (D, H)
    bka = (params["bk"] @ params["Wa"].T + params["ba"]).reshape(1, H).astype(jnp.float32)
    wv_c = params["Wv"].T.astype(cdt)                                   # (D, C)
    bv = params["bv"].reshape(1, C).astype(jnp.float32)
    wp = params["Wp"].T.astype(cdt)                                     # (H*C, O)
    bp = params["bp"].reshape(1, O).astype(jnp.float32)
    wn = params["Wcls"] / jnp.maximum(
        jnp.sqrt(jnp.sum(params["Wcls"] ** 2, axis=1, keepdims=True)), 1e-12)
    wcls = jnp.zeros((O, NCp), cdt).at[:, :NC].set(wn.T.astype(cdt))    # (O, NCp)

    x = hidden_states.astype(cdt)
    x_bytes = jnp.dtype(cdt).itemsize
    # conservative: assume weights double-buffered in the footprint formula
    w_bytes = 2 * x_bytes * (D * H + D * C + H * C * O + O * NCp) + 2 * 4 * (C + H + O)

    # -------- generation-aware VMEM budget & batch blocking --------
    try:
        vmem_cap = int(pltpu.get_tpu_info().vmem_capacity_bytes)
    except Exception:
        vmem_cap = 64 * 1024 * 1024          # conservative fallback (v7x physical VMEM)
    budget = vmem_cap // 3

    def fp(bb):
        return _block_footprint(bb, L, T, D, C, H, O, NCp, x_bytes, w_bytes)

    if batch_block is None:
        # >= 4 grid steps: DMA/compute pipelining + 2-TensorCore batch split on v7x
        Bb = _pick_batch_block(B, 4, budget, fp)
    else:
        Bb = batch_block
    assert B % Bb == 0
    G = B // Bb
    vmem_limit = int(min(vmem_cap * 3 // 4, max(2 * fp(Bb), 32 * 1024 * 1024)))

    compiler_params = pltpu.CompilerParams(
        dimension_semantics=("parallel",), vmem_limit_bytes=vmem_limit)
    out_shape = jax.ShapeDtypeStruct((G, Bb, NCp), jnp.float32)

    def call(single_buffer_weights):
        def wspec(shape):
            kw = {}
            if single_buffer_weights:
                kw["pipeline_mode"] = pl.Buffered(1)   # grid-invariant: no double buffer
            return pl.BlockSpec(shape, lambda i: (0, 0), **kw)

        grid_spec = pltpu.PrefetchScalarGridSpec(
            num_scalar_prefetch=0,
            grid=(G,),
            in_specs=[
                pl.BlockSpec(memory_space=pltpu.MemorySpace.SMEM),       # wk
                pl.BlockSpec(memory_space=pltpu.MemorySpace.SMEM),       # wv
                pl.BlockSpec((L, Bb, T, D), lambda i: (0, i, 0, 0)),     # x
                wspec((D, C)), wspec((1, C)),                            # wv_c, bv
                wspec((D, H)), wspec((1, H)),                            # wka, bka
                wspec((H * C, O)), wspec((1, O)),                        # wp, bp
                wspec((O, NCp)),                                         # wcls
            ],
            out_specs=pl.BlockSpec((1, Bb, NCp), lambda i: (i, 0, 0)),
        )
        return pl.pallas_call(
            _mhfa_kernel, out_shape=out_shape, grid_spec=grid_spec,
            compiler_params=compiler_params,
        )(wk, wv, x, wv_c, bv, wka, bka, wp, bp, wcls)

    try:
        logits = call(True)
    except Exception:
        logits = call(False)      # fall back to default double-buffered weight operands
    return logits.reshape(B, NCp)[:, :NC]


def mhfa_reference(hidden_states, params):
    """Pure-JAX mirror of the PyTorch forward (MHFATop + AMSMLoss, iden=None)."""
    x = jnp.transpose(hidden_states, (1, 3, 2, 0))    # (B, D, T, L)
    wk = jax.nn.softmax(params["weights_k"])
    wv = jax.nn.softmax(params["weights_v"])
    k = jnp.sum(x * wk, axis=-1).transpose(0, 2, 1)   # (B, T, D)
    v = jnp.sum(x * wv, axis=-1).transpose(0, 2, 1)
    k = k @ params["Wk"].T + params["bk"]
    v = v @ params["Wv"].T + params["bv"]
    att = k @ params["Wa"].T + params["ba"]           # (B, T, H)
    att_s = jax.nn.softmax(att, axis=1)
    pooled = jnp.sum(v[:, :, None, :] * att_s[..., None], axis=1)  # (B, H, C)
    flat = pooled.reshape(pooled.shape[0], -1)
    out = flat @ params["Wp"].T + params["bp"]        # (B, O)
    out_n = out / jnp.maximum(
        jnp.sqrt(jnp.sum(out * out, axis=1, keepdims=True)), 1e-12)
    Wn = params["Wcls"] / jnp.maximum(
        jnp.sqrt(jnp.sum(params["Wcls"] ** 2, axis=1, keepdims=True)), 1e-12)
    return out_n @ Wn.T


if __name__ == "__main__":
    # small shapes consistent with the module (layers, batch, frames, hidden, ...)
    L, B, T, D = 5, 4, 16, 64      # number_layers, batch, frames, inputs_dim
    C, H, O, NC = 32, 4, 64, 2     # compression_dim, head_nb, outputs_dim, classes

    key = jax.random.PRNGKey(0)
    ks = jax.random.split(key, 12)
    params = {
        "weights_k": jax.random.normal(ks[0], (L,), jnp.float32),
        "weights_v": jax.random.normal(ks[1], (L,), jnp.float32),
        "Wk": 0.05 * jax.random.normal(ks[2], (C, D), jnp.float32),
        "bk": 0.05 * jax.random.normal(ks[3], (C,), jnp.float32),
        "Wv": 0.05 * jax.random.normal(ks[4], (C, D), jnp.float32),
        "bv": 0.05 * jax.random.normal(ks[5], (C,), jnp.float32),
        "Wa": 0.05 * jax.random.normal(ks[6], (H, C), jnp.float32),
        "ba": 0.05 * jax.random.normal(ks[7], (H,), jnp.float32),
        "Wp": 0.05 * jax.random.normal(ks[8], (O, H * C), jnp.float32),
        "bp": 0.05 * jax.random.normal(ks[9], (O,), jnp.float32),
        "Wcls": 0.05 * jax.random.normal(ks[10], (NC, O), jnp.float32),
    }
    hidden_states = jax.random.normal(ks[11], (L, B, T, D), jnp.float32)

    ref = mhfa_reference(hidden_states, params)

    # f32 compute path (exact validation), auto batch block -> Bb=1, G=4 pipelined grid
    out_f32 = jax.block_until_ready(
        mhfa_forward(hidden_states, params, compute_dtype=jnp.float32))
    assert out_f32.shape == (B, NC)
    assert jnp.allclose(out_f32, ref, rtol=1e-2, atol=1e-2), (out_f32, ref)

    # bf16 compute path (default, halves the HBM hidden-state stream)
    out_bf16 = jax.block_until_ready(mhfa_forward(hidden_states, params))
    assert out_bf16.shape == (B, NC)
    assert jnp.allclose(out_bf16, ref, rtol=3e-2, atol=3e-2), (out_bf16, ref)

    # explicit batch block -> different grid shape, same result
    out_bb2 = jax.block_until_ready(
        mhfa_forward(hidden_states, params, batch_block=2))
    assert jnp.allclose(out_bb2, ref, rtol=3e-2, atol=3e-2), (out_bb2, ref)

    print("KERNEL_OK")
</pallas_src>

<mosaic_0001>
module attributes {stable_mosaic.version = 11 : i64} {
  func.func @_mhfa_kernel(%arg0: i32, %arg1: memref<5xf32, #tpu.memory_space<smem>>, %arg2: memref<5xf32, #tpu.memory_space<smem>>, %arg3: memref<5x1x16x64xf32, #tpu.memory_space<vmem>>, %arg4: memref<64x32xf32, #tpu.memory_space<vmem>>, %arg5: memref<1x32xf32, #tpu.memory_space<vmem>>, %arg6: memref<64x4xf32, #tpu.memory_space<vmem>>, %arg7: memref<1x4xf32, #tpu.memory_space<vmem>>, %arg8: memref<128x64xf32, #tpu.memory_space<vmem>>, %arg9: memref<1x64xf32, #tpu.memory_space<vmem>>, %arg10: memref<64x128xf32, #tpu.memory_space<vmem>>, %arg11: memref<1x1x128xf32, #tpu.memory_space<vmem>>) attributes {dimension_semantics = [#tpu.dimension_semantics<parallel>], iteration_bounds = array<i64: 4>, scalar_prefetch = 0 : i64, scratch_operands = 0 : i64, tpu.core_type = #tpu.core_type<tc>, window_params = [{transform_indices = @transform_0, window_bounds = array<i64: 5>}, {transform_indices = @transform_1, window_bounds = array<i64: 5>}, {transform_indices = @transform_2, window_bounds = array<i64: 5, 1, 16, 64>}, {pipeline_mode = #tpu.pipeline_mode<synchronous>, transform_indices = @transform_3, window_bounds = array<i64: 64, 32>}, {pipeline_mode = #tpu.pipeline_mode<synchronous>, transform_indices = @transform_4, window_bounds = array<i64: 1, 32>}, {pipeline_mode = #tpu.pipeline_mode<synchronous>, transform_indices = @transform_5, window_bounds = array<i64: 64, 4>}, {pipeline_mode = #tpu.pipeline_mode<synchronous>, transform_indices = @transform_6, window_bounds = array<i64: 1, 4>}, {pipeline_mode = #tpu.pipeline_mode<synchronous>, transform_indices = @transform_7, window_bounds = array<i64: 128, 64>}, {pipeline_mode = #tpu.pipeline_mode<synchronous>, transform_indices = @transform_8, window_bounds = array<i64: 1, 64>}, {pipeline_mode = #tpu.pipeline_mode<synchronous>, transform_indices = @transform_9, window_bounds = array<i64: 64, 128>}, {transform_indices = @transform_10, window_bounds = array<i64: 1, 1, 128>}]} {
    %c0 = arith.constant 0 : index
    %c0_0 = arith.constant 0 : index
    %c0_1 = arith.constant 0 : index
    %c0_2 = arith.constant 0 : index
    %0 = vector.load %arg3[%c0, %c0_0, %c0_1, %c0_2] : memref<5x1x16x64xf32, #tpu.memory_space<vmem>>, vector<1x1x16x64xf32>
    %1 = vector.shape_cast %0 : vector<1x1x16x64xf32> to vector<1x16x64xf32>
    %c0_3 = arith.constant 0 : index
    %2 = memref.load %arg1[%c0_3] : memref<5xf32, #tpu.memory_space<smem>>
    %3 = vector.broadcast %2 : f32 to vector<1x16x64xf32>
    %4 = arith.mulf %1, %3 : vector<1x16x64xf32>
    %c0_4 = arith.constant 0 : index
    %5 = memref.load %arg2[%c0_4] : memref<5xf32, #tpu.memory_space<smem>>
    %6 = vector.broadcast %5 : f32 to vector<1x16x64xf32>
    %7 = arith.mulf %1, %6 : vector<1x16x64xf32>
    %c1 = arith.constant 1 : index
    %c0_5 = arith.constant 0 : index
    %c0_6 = arith.constant 0 : index
    %c0_7 = arith.constant 0 : index
    %8 = vector.load %arg3[%c1, %c0_5, %c0_6, %c0_7] : memref<5x1x16x64xf32, #tpu.memory_space<vmem>>, vector<1x1x16x64xf32>
    %9 = vector.shape_cast %8 : vector<1x1x16x64xf32> to vector<1x16x64xf32>
    %c1_8 = arith.constant 1 : index
    %10 = memref.load %arg1[%c1_8] : memref<5xf32, #tpu.memory_space<smem>>
    %11 = vector.broadcast %10 : f32 to vector<1x16x64xf32>
    %12 = arith.mulf %9, %11 : vector<1x16x64xf32>
    %13 = arith.addf %4, %12 : vector<1x16x64xf32>
    %c1_9 = arith.constant 1 : index
    %14 = memref.load %arg2[%c1_9] : memref<5xf32, #tpu.memory_space<smem>>
    %15 = vector.broadcast %14 : f32 to vector<1x16x64xf32>
    %16 = arith.mulf %9, %15 : vector<1x16x64xf32>
    %17 = arith.addf %7, %16 : vector<1x16x64xf32>
    %c2 = arith.constant 2 : index
    %c0_10 = arith.constant 0 : index
    %c0_11 = arith.constant 0 : index
    %c0_12 = arith.constant 0 : index
    %18 = vector.load %arg3[%c2, %c0_10, %c0_11, %c0_12] : memref<5x1x16x64xf32, #tpu.memory_space<vmem>>, vector<1x1x16x64xf32>
    %19 = vector.shape_cast %18 : vector<1x1x16x64xf32> to vector<1x16x64xf32>
    %c2_13 = arith.constant 2 : index
    %20 = memref.load %arg1[%c2_13] : memref<5xf32, #tpu.memory_space<smem>>
    %21 = vector.broadcast %20 : f32 to vector<1x16x64xf32>
    %22 = arith.mulf %19, %21 : vector<1x16x64xf32>
    %23 = arith.addf %13, %22 : vector<1x16x64xf32>
    %c2_14 = arith.constant 2 : index
    %24 = memref.load %arg2[%c2_14] : memref<5xf32, #tpu.memory_space<smem>>
    %25 = vector.broadcast %24 : f32 to vector<1x16x64xf32>
    %26 = arith.mulf %19, %25 : vector<1x16x64xf32>
    %27 = arith.addf %17, %26 : vector<1x16x64xf32>
    %c3 = arith.constant 3 : index
    %c0_15 = arith.constant 0 : index
    %c0_16 = arith.constant 0 : index
    %c0_17 = arith.constant 0 : index
    %28 = vector.load %arg3[%c3, %c0_15, %c0_16, %c0_17] : memref<5x1x16x64xf32, #tpu.memory_space<vmem>>, vector<1x1x16x64xf32>
    %29 = vector.shape_cast %28 : vector<1x1x16x64xf32> to vector<1x16x64xf32>
    %c3_18 = arith.constant 3 : index
    %30 = memref.load %arg1[%c3_18] : memref<5xf32, #tpu.memory_space<smem>>
    %31 = vector.broadcast %30 : f32 to vector<1x16x64xf32>
    %32 = arith.mulf %29, %31 : vector<1x16x64xf32>
    %33 = arith.addf %23, %32 : vector<1x16x64xf32>
    %c3_19 = arith.constant 3 : index
    %34 = memref.load %arg2[%c3_19] : memref<5xf32, #tpu.memory_space<smem>>
    %35 = vector.broadcast %34 : f32 to vector<1x16x64xf32>
    %36 = arith.mulf %29, %35 : vector<1x16x64xf32>
    %37 = arith.addf %27, %36 : vector<1x16x64xf32>
    %c4 = arith.constant 4 : index
    %c0_20 = arith.constant 0 : index
    %c0_21 = arith.constant 0 : index
    %c0_22 = arith.constant 0 : index
    %38 = vector.load %arg3[%c4, %c0_20, %c0_21, %c0_22] : memref<5x1x16x64xf32, #tpu.memory_space<vmem>>, vector<1x1x16x64xf32>
    %39 = vector.shape_cast %38 : vector<1x1x16x64xf32> to vector<1x16x64xf32>
    %c4_23 = arith.constant 4 : index
    %40 = memref.load %arg1[%c4_23] : memref<5xf32, #tpu.memory_space<smem>>
    %41 = vector.broadcast %40 : f32 to vector<1x16x64xf32>
    %42 = arith.mulf %39, %41 : vector<1x16x64xf32>
    %43 = arith.addf %33, %42 : vector<1x16x64xf32>
    %c4_24 = arith.constant 4 : index
    %44 = memref.load %arg2[%c4_24] : memref<5xf32, #tpu.memory_space<smem>>
    %45 = vector.broadcast %44 : f32 to vector<1x16x64xf32>
    %46 = arith.mulf %39, %45 : vector<1x16x64xf32>
    %47 = arith.addf %37, %46 : vector<1x16x64xf32>
    %48 = vector.shape_cast %43 : vector<1x16x64xf32> to vector<16x64xf32>
    %49 = vector.shape_cast %47 : vector<1x16x64xf32> to vector<16x64xf32>
    %c0_25 = arith.constant 0 : index
    %c0_26 = arith.constant 0 : index
    %50 = vector.load %arg6[%c0_25, %c0_26] : memref<64x4xf32, #tpu.memory_space<vmem>>, vector<64x4xf32>
    %cst = arith.constant dense<0.000000e+00> : vector<16x4xf32>
    %51 = tpu.matmul %48, %50, %cst {dimension_numbers = #tpu.dot_dimension_numbers<[1], [0], [0], [1], [0, 0, 1, 1], [], []>} : vector<16x64xf32>, vector<64x4xf32>, vector<16x4xf32> -> vector<16x4xf32>
    %c0_27 = arith.constant 0 : index
    %c0_28 = arith.constant 0 : index
    %52 = vector.load %arg7[%c0_27, %c0_28] : memref<1x4xf32, #tpu.memory_space<vmem>>, vector<1x4xf32>
    %53 = vector.broadcast %52 : vector<1x4xf32> to vector<16x4xf32>
    %54 = arith.addf %51, %53 : vector<16x4xf32>
    %c0_29 = arith.constant 0 : index
    %c0_30 = arith.constant 0 : index
    %55 = vector.load %arg4[%c0_29, %c0_30] : memref<64x32xf32, #tpu.memory_space<vmem>>, vector<64x32xf32>
    %cst_31 = arith.constant dense<0.000000e+00> : vector<16x32xf32>
    %56 = tpu.matmul %49, %55, %cst_31 {dimension_numbers = #tpu.dot_dimension_numbers<[1], [0], [0], [1], [0, 0, 1, 1], [], []>} : vector<16x64xf32>, vector<64x32xf32>, vector<16x32xf32> -> vector<16x32xf32>
    %c0_32 = arith.constant 0 : index
    %c0_33 = arith.constant 0 : index
    %57 = vector.load %arg5[%c0_32, %c0_33] : memref<1x32xf32, #tpu.memory_space<vmem>>, vector<1x32xf32>
    %58 = vector.broadcast %57 : vector<1x32xf32> to vector<16x32xf32>
    %59 = arith.addf %56, %58 : vector<16x32xf32>
    %60 = vector.shape_cast %54 : vector<16x4xf32> to vector<1x16x4xf32>
    %cst_34 = arith.constant dense<0xFF800000> : vector<1x4xf32>
    %61 = vector.multi_reduction <maximumf>, %60, %cst_34 [1] : vector<1x16x4xf32> to vector<1x4xf32>
    %62 = vector.shape_cast %61 : vector<1x4xf32> to vector<1x1x4xf32>
    %63 = vector.broadcast %62 : vector<1x1x4xf32> to vector<1x16x4xf32>
    %64 = arith.subf %60, %63 : vector<1x16x4xf32>
    %65 = math.exp %64 : vector<1x16x4xf32>
    %cst_35 = arith.constant dense<0.000000e+00> : vector<1x4xf32>
    %66 = vector.multi_reduction <add>, %65, %cst_35 [1] : vector<1x16x4xf32> to vector<1x4xf32>
    %67 = vector.shape_cast %66 : vector<1x4xf32> to vector<1x1x4xf32>
    %68 = tpu.reciprocal %67 {approx = true} : vector<1x1x4xf32> -> vector<1x1x4xf32>
    %69 = vector.broadcast %68 : vector<1x1x4xf32> to vector<1x16x4xf32>
    %70 = arith.mulf %65, %69 : vector<1x16x4xf32>
    %71 = vector.shape_cast %59 : vector<16x32xf32> to vector<1x16x32xf32>
    "tpu.trace_start"() <{level = 10 : i32, message = "bth,btc->bhc"}> : () -> ()
    %cst_36 = arith.constant dense<0.000000e+00> : vector<1x4x32xf32>
    %72 = tpu.matmul %70, %71, %cst_36 {dimension_numbers = #tpu.dot_dimension_numbers<[1], [1], [2], [2], [0, 0, 0, 2, 1, 2], [0], [0]>} : vector<1x16x4xf32>, vector<1x16x32xf32>, vector<1x4x32xf32> -> vector<1x4x32xf32>
    "tpu.trace_stop"() : () -> ()
    %73 = vector.shape_cast %72 : vector<1x4x32xf32> to vector<1x128xf32>
    %c0_37 = arith.constant 0 : index
    %c0_38 = arith.constant 0 : index
    %74 = vector.load %arg8[%c0_37, %c0_38] : memref<128x64xf32, #tpu.memory_space<vmem>>, vector<128x64xf32>
    %cst_39 = arith.constant dense<0.000000e+00> : vector<1x64xf32>
    %75 = tpu.matmul %73, %74, %cst_39 {dimension_numbers = #tpu.dot_dimension_numbers<[1], [0], [0], [1], [0, 0, 1, 1], [], []>} : vector<1x128xf32>, vector<128x64xf32>, vector<1x64xf32> -> vector<1x64xf32>
    %c0_40 = arith.constant 0 : index
    %c0_41 = arith.constant 0 : index
    %76 = vector.load %arg9[%c0_40, %c0_41] : memref<1x64xf32, #tpu.memory_space<vmem>>, vector<1x64xf32>
    %77 = arith.addf %75, %76 : vector<1x64xf32>
    %78 = arith.mulf %77, %77 : vector<1x64xf32>
    %cst_42 = arith.constant dense<0.000000e+00> : vector<1xf32>
    %79 = vector.multi_reduction <add>, %78, %cst_42 [1] : vector<1x64xf32> to vector<1xf32>
    %80 = vector.shape_cast %79 : vector<1xf32> to vector<1x1xf32>
    %cst_43 = arith.constant 1.000000e-24 : f32
    %81 = vector.broadcast %cst_43 : f32 to vector<1x1xf32>
    %82 = arith.maximumf %80, %81 : vector<1x1xf32>
    %83 = math.rsqrt %82 : vector<1x1xf32>
    %84 = vector.broadcast %83 : vector<1x1xf32> to vector<1x64xf32>
    %85 = arith.mulf %77, %84 : vector<1x64xf32>
    %c0_44 = arith.constant 0 : index
    %c0_45 = arith.constant 0 : index
    %86 = vector.load %arg10[%c0_44, %c0_45] : memref<64x128xf32, #tpu.memory_space<vmem>>, vector<64x128xf32>
    %cst_46 = arith.constant dense<0.000000e+00> : vector<1x128xf32>
    %87 = tpu.matmul %85, %86, %cst_46 {dimension_numbers = #tpu.dot_dimension_numbers<[1], [0], [0], [1], [0, 0, 1, 1], [], []>} : vector<1x64xf32>, vector<64x128xf32>, vector<1x128xf32> -> vector<1x128xf32>
    %c0_47 = arith.constant 0 : index
    %c0_48 = arith.constant 0 : index
    %c0_49 = arith.constant 0 : index
    %88 = vector.load %arg11[%c0_47, %c0_48, %c0_49] : memref<1x1x128xf32, #tpu.memory_space<vmem>>, vector<1x1x128xf32>
    %89 = vector.shape_cast %88 : vector<1x1x128xf32> to vector<1x128xf32>
    %90 = vector.shape_cast %87 : vector<1x128xf32> to vector<1x1x128xf32>
    tpu.vector_store %arg11[%c0_47, %c0_48, %c0_49], %90 {strides = array<i32>} : memref<1x1x128xf32, #tpu.memory_space<vmem>>, vector<1x1x128xf32>,
    return
  }
  func.func @transform_0(%arg0: i32) -> i32 {
    %c0_i32 = arith.constant 0 : i32
    %c0_i32_0 = arith.constant 0 : i32
    return %c0_i32 : i32
  }
  func.func @transform_1(%arg0: i32) -> i32 {
    %c0_i32 = arith.constant 0 : i32
    %c0_i32_0 = arith.constant 0 : i32
    return %c0_i32 : i32
  }
  func.func @transform_2(%arg0: i32) -> (i32, i32, i32, i32) {
    %c0_i32 = arith.constant 0 : i32
    %c0_i32_0 = arith.constant 0 : i32
    %c0_i32_1 = arith.constant 0 : i32
    %c0_i32_2 = arith.constant 0 : i32
    return %c0_i32, %arg0, %c0_i32_0, %c0_i32_1 : i32, i32, i32, i32
  }
  func.func @transform_3(%arg0: i32) -> (i32, i32) {
    %c0_i32 = arith.constant 0 : i32
    %c0_i32_0 = arith.constant 0 : i32
    %c0_i32_1 = arith.constant 0 : i32
    return %c0_i32, %c0_i32_0 : i32, i32
  }
  func.func @transform_4(%arg0: i32) -> (i32, i32) {
    %c0_i32 = arith.constant 0 : i32
    %c0_i32_0 = arith.constant 0 : i32
    %c0_i32_1 = arith.constant 0 : i32
    return %c0_i32, %c0_i32_0 : i32, i32
  }
  func.func @transform_5(%arg0: i32) -> (i32, i32) {
    %c0_i32 = arith.constant 0 : i32
    %c0_i32_0 = arith.constant 0 : i32
    %c0_i32_1 = arith.constant 0 : i32
    return %c0_i32, %c0_i32_0 : i32, i32
  }
  func.func @transform_6(%arg0: i32) -> (i32, i32) {
    %c0_i32 = arith.constant 0 : i32
    %c0_i32_0 = arith.constant 0 : i32
    %c0_i32_1 = arith.constant 0 : i32
    return %c0_i32, %c0_i32_0 : i32, i32
  }
  func.func @transform_7(%arg0: i32) -> (i32, i32) {
    %c0_i32 = arith.constant 0 : i32
    %c0_i32_0 = arith.constant 0 : i32
    %c0_i32_1 = arith.constant 0 : i32
    return %c0_i32, %c0_i32_0 : i32, i32
  }
  func.func @transform_8(%arg0: i32) -> (i32, i32) {
    %c0_i32 = arith.constant 0 : i32
    %c0_i32_0 = arith.constant 0 : i32
    %c0_i32_1 = arith.constant 0 : i32
    return %c0_i32, %c0_i32_0 : i32, i32
  }
  func.func @transform_9(%arg0: i32) -> (i32, i32) {
    %c0_i32 = arith.constant 0 : i32
    %c0_i32_0 = arith.constant 0 : i32
    %c0_i32_1 = arith.constant 0 : i32
    return %c0_i32, %c0_i32_0 : i32, i32
  }
  func.func @transform_10(%arg0: i32) -> (i32, i32, i32) {
    %c0_i32 = arith.constant 0 : i32
    %c0_i32_0 = arith.constant 0 : i32
    %c0_i32_1 = arith.constant 0 : i32
    return %arg0, %c0_i32, %c0_i32_0 : i32, i32, i32
  }
}

module attributes {stable_mosaic.version = 11 : i64} {
  func.func @_mhfa_kernel(%arg0: i32, %arg1: memref<5xf32, #tpu.memory_space<smem>>, %arg2: memref<5xf32, #tpu.memory_space<smem>>, %arg3: memref<5x1x16x64xf32, #tpu.memory_space<vmem>>, %arg4: memref<64x32xf32, #tpu.memory_space<vmem>>, %arg5: memref<1x32xf32, #tpu.memory_space<vmem>>, %arg6: memref<64x4xf32, #tpu.memory_space<vmem>>, %arg7: memref<1x4xf32, #tpu.memory_space<vmem>>, %arg8: memref<128x64xf32, #tpu.memory_space<vmem>>, %arg9: memref<1x64xf32, #tpu.memory_space<vmem>>, %arg10: memref<64x128xf32, #tpu.memory_space<vmem>>, %arg11: memref<1x1x128xf32, #tpu.memory_space<vmem>>) attributes {dimension_semantics = [#tpu.dimension_semantics<parallel>], iteration_bounds = array<i64: 4>, scalar_prefetch = 0 : i64, scratch_operands = 0 : i64, tpu.core_type = #tpu.core_type<tc>, window_params = [{transform_indices = @transform_0, window_bounds = array<i64: 5>}, {transform_indices = @transform_1, window_bounds = array<i64: 5>}, {transform_indices = @transform_2, window_bounds = array<i64: 5, 1, 16, 64>}, {pipeline_mode = #tpu.pipeline_mode<synchronous>, transform_indices = @transform_3, window_bounds = array<i64: 64, 32>}, {pipeline_mode = #tpu.pipeline_mode<synchronous>, transform_indices = @transform_4, window_bounds = array<i64: 1, 32>}, {pipeline_mode = #tpu.pipeline_mode<synchronous>, transform_indices = @transform_5, window_bounds = array<i64: 64, 4>}, {pipeline_mode = #tpu.pipeline_mode<synchronous>, transform_indices = @transform_6, window_bounds = array<i64: 1, 4>}, {pipeline_mode = #tpu.pipeline_mode<synchronous>, transform_indices = @transform_7, window_bounds = array<i64: 128, 64>}, {pipeline_mode = #tpu.pipeline_mode<synchronous>, transform_indices = @transform_8, window_bounds = array<i64: 1, 64>}, {pipeline_mode = #tpu.pipeline_mode<synchronous>, transform_indices = @transform_9, window_bounds = array<i64: 64, 128>}, {transform_indices = @transform_10, window_bounds = array<i64: 1, 1, 128>}]} {
    %c0 = arith.constant 0 : index
    %c0_0 = arith.constant 0 : index
    %c0_1 = arith.constant 0 : index
    %c0_2 = arith.constant 0 : index
    %0 = vector.load %arg3[%c0, %c0_0, %c0_1, %c0_2] : memref<5x1x16x64xf32, #tpu.memory_space<vmem>>, vector<1x1x16x64xf32>
    %1 = vector.shape_cast %0 : vector<1x1x16x64xf32> to vector<1x16x64xf32>
    %c0_3 = arith.constant 0 : index
    %2 = memref.load %arg1[%c0_3] : memref<5xf32, #tpu.memory_space<smem>>
    %3 = vector.broadcast %2 : f32 to vector<1x16x64xf32>
    %4 = arith.mulf %1, %3 : vector<1x16x64xf32>
    %c0_4 = arith.constant 0 : index
    %5 = memref.load %arg2[%c0_4] : memref<5xf32, #tpu.memory_space<smem>>
    %6 = vector.broadcast %5 : f32 to vector<1x16x64xf32>
    %7 = arith.mulf %1, %6 : vector<1x16x64xf32>
    %c1 = arith.constant 1 : index
    %c0_5 = arith.constant 0 : index
    %c0_6 = arith.constant 0 : index
    %c0_7 = arith.constant 0 : index
    %8 = vector.load %arg3[%c1, %c0_5, %c0_6, %c0_7] : memref<5x1x16x64xf32, #tpu.memory_space<vmem>>, vector<1x1x16x64xf32>
    %9 = vector.shape_cast %8 : vector<1x1x16x64xf32> to vector<1x16x64xf32>
    %c1_8 = arith.constant 1 : index
    %10 = memref.load %arg1[%c1_8] : memref<5xf32, #tpu.memory_space<smem>>
    %11 = vector.broadcast %10 : f32 to vector<1x16x64xf32>
    %12 = arith.mulf %9, %11 : vector<1x16x64xf32>
    %13 = arith.addf %4, %12 : vector<1x16x64xf32>
    %c1_9 = arith.constant 1 : index
    %14 = memref.load %arg2[%c1_9] : memref<5xf32, #tpu.memory_space<smem>>
    %15 = vector.broadcast %14 : f32 to vector<1x16x64xf32>
    %16 = arith.mulf %9, %15 : vector<1x16x64xf32>
    %17 = arith.addf %7, %16 : vector<1x16x64xf32>
    %c2 = arith.constant 2 : index
    %c0_10 = arith.constant 0 : index
    %c0_11 = arith.constant 0 : index
    %c0_12 = arith.constant 0 : index
    %18 = vector.load %arg3[%c2, %c0_10, %c0_11, %c0_12] : memref<5x1x16x64xf32, #tpu.memory_space<vmem>>, vector<1x1x16x64xf32>
    %19 = vector.shape_cast %18 : vector<1x1x16x64xf32> to vector<1x16x64xf32>
    %c2_13 = arith.constant 2 : index
    %20 = memref.load %arg1[%c2_13] : memref<5xf32, #tpu.memory_space<smem>>
    %21 = vector.broadcast %20 : f32 to vector<1x16x64xf32>
    %22 = arith.mulf %19, %21 : vector<1x16x64xf32>
    %23 = arith.addf %13, %22 : vector<1x16x64xf32>
    %c2_14 = arith.constant 2 : index
    %24 = memref.load %arg2[%c2_14] : memref<5xf32, #tpu.memory_space<smem>>
    %25 = vector.broadcast %24 : f32 to vector<1x16x64xf32>
    %26 = arith.mulf %19, %25 : vector<1x16x64xf32>
    %27 = arith.addf %17, %26 : vector<1x16x64xf32>
    %c3 = arith.constant 3 : index
    %c0_15 = arith.constant 0 : index
    %c0_16 = arith.constant 0 : index
    %c0_17 = arith.constant 0 : index
    %28 = vector.load %arg3[%c3, %c0_15, %c0_16, %c0_17] : memref<5x1x16x64xf32, #tpu.memory_space<vmem>>, vector<1x1x16x64xf32>
    %29 = vector.shape_cast %28 : vector<1x1x16x64xf32> to vector<1x16x64xf32>
    %c3_18 = arith.constant 3 : index
    %30 = memref.load %arg1[%c3_18] : memref<5xf32, #tpu.memory_space<smem>>
    %31 = vector.broadcast %30 : f32 to vector<1x16x64xf32>
    %32 = arith.mulf %29, %31 : vector<1x16x64xf32>
    %33 = arith.addf %23, %32 : vector<1x16x64xf32>
    %c3_19 = arith.constant 3 : index
    %34 = memref.load %arg2[%c3_19] : memref<5xf32, #tpu.memory_space<smem>>
    %35 = vector.broadcast %34 : f32 to vector<1x16x64xf32>
    %36 = arith.mulf %29, %35 : vector<1x16x64xf32>
    %37 = arith.addf %27, %36 : vector<1x16x64xf32>
    %c4 = arith.constant 4 : index
    %c0_20 = arith.constant 0 : index
    %c0_21 = arith.constant 0 : index
    %c0_22 = arith.constant 0 : index
    %38 = vector.load %arg3[%c4, %c0_20, %c0_21, %c0_22] : memref<5x1x16x64xf32, #tpu.memory_space<vmem>>, vector<1x1x16x64xf32>
    %39 = vector.shape_cast %38 : vector<1x1x16x64xf32> to vector<1x16x64xf32>
    %c4_23 = arith.constant 4 : index
    %40 = memref.load %arg1[%c4_23] : memref<5xf32, #tpu.memory_space<smem>>
    %41 = vector.broadcast %40 : f32 to vector<1x16x64xf32>
    %42 = arith.mulf %39, %41 : vector<1x16x64xf32>
    %43 = arith.addf %33, %42 : vector<1x16x64xf32>
    %c4_24 = arith.constant 4 : index
    %44 = memref.load %arg2[%c4_24] : memref<5xf32, #tpu.memory_space<smem>>
    %45 = vector.broadcast %44 : f32 to vector<1x16x64xf32>
    %46 = arith.mulf %39, %45 : vector<1x16x64xf32>
    %47 = arith.addf %37, %46 : vector<1x16x64xf32>
    %48 = vector.shape_cast %43 : vector<1x16x64xf32> to vector<16x64xf32>
    %49 = vector.shape_cast %47 : vector<1x16x64xf32> to vector<16x64xf32>
    %c0_25 = arith.constant 0 : index
    %c0_26 = arith.constant 0 : index
    %50 = vector.load %arg6[%c0_25, %c0_26] : memref<64x4xf32, #tpu.memory_space<vmem>>, vector<64x4xf32>
    %cst = arith.constant dense<0.000000e+00> : vector<16x4xf32>
    %51 = tpu.matmul %48, %50, %cst {dimension_numbers = #tpu.dot_dimension_numbers<[1], [0], [0], [1], [0, 0, 1, 1], [], []>} : vector<16x64xf32>, vector<64x4xf32>, vector<16x4xf32> -> vector<16x4xf32>
    %c0_27 = arith.constant 0 : index
    %c0_28 = arith.constant 0 : index
    %52 = vector.load %arg7[%c0_27, %c0_28] : memref<1x4xf32, #tpu.memory_space<vmem>>, vector<1x4xf32>
    %53 = vector.broadcast %52 : vector<1x4xf32> to vector<16x4xf32>
    %54 = arith.addf %51, %53 : vector<16x4xf32>
    %c0_29 = arith.constant 0 : index
    %c0_30 = arith.constant 0 : index
    %55 = vector.load %arg4[%c0_29, %c0_30] : memref<64x32xf32, #tpu.memory_space<vmem>>, vector<64x32xf32>
    %cst_31 = arith.constant dense<0.000000e+00> : vector<16x32xf32>
    %56 = tpu.matmul %49, %55, %cst_31 {dimension_numbers = #tpu.dot_dimension_numbers<[1], [0], [0], [1], [0, 0, 1, 1], [], []>} : vector<16x64xf32>, vector<64x32xf32>, vector<16x32xf32> -> vector<16x32xf32>
    %c0_32 = arith.constant 0 : index
    %c0_33 = arith.constant 0 : index
    %57 = vector.load %arg5[%c0_32, %c0_33] : memref<1x32xf32, #tpu.memory_space<vmem>>, vector<1x32xf32>
    %58 = vector.broadcast %57 : vector<1x32xf32> to vector<16x32xf32>
    %59 = arith.addf %56, %58 : vector<16x32xf32>
    %60 = vector.shape_cast %54 : vector<16x4xf32> to vector<1x16x4xf32>
    %cst_34 = arith.constant dense<0xFF800000> : vector<1x4xf32>
    %61 = vector.multi_reduction <maximumf>, %60, %cst_34 [1] : vector<1x16x4xf32> to vector<1x4xf32>
    %62 = vector.shape_cast %61 : vector<1x4xf32> to vector<1x1x4xf32>
    %63 = vector.broadcast %62 : vector<1x1x4xf32> to vector<1x16x4xf32>
    %64 = arith.subf %60, %63 : vector<1x16x4xf32>
    %65 = math.exp %64 : vector<1x16x4xf32>
    %cst_35 = arith.constant dense<0.000000e+00> : vector<1x4xf32>
    %66 = vector.multi_reduction <add>, %65, %cst_35 [1] : vector<1x16x4xf32> to vector<1x4xf32>
    %67 = vector.shape_cast %66 : vector<1x4xf32> to vector<1x1x4xf32>
    %68 = tpu.reciprocal %67 {approx = true} : vector<1x1x4xf32> -> vector<1x1x4xf32>
    %69 = vector.broadcast %68 : vector<1x1x4xf32> to vector<1x16x4xf32>
    %70 = arith.mulf %65, %69 : vector<1x16x4xf32>
    %71 = vector.shape_cast %59 : vector<16x32xf32> to vector<1x16x32xf32>
    "tpu.trace_start"() <{level = 10 : i32, message = "bth,btc->bhc"}> : () -> ()
    %cst_36 = arith.constant dense<0.000000e+00> : vector<1x4x32xf32>
    %72 = tpu.matmul %70, %71, %cst_36 {dimension_numbers = #tpu.dot_dimension_numbers<[1], [1], [2], [2], [0, 0, 0, 2, 1, 2], [0], [0]>} : vector<1x16x4xf32>, vector<1x16x32xf32>, vector<1x4x32xf32> -> vector<1x4x32xf32>
    "tpu.trace_stop"() : () -> ()
    %73 = vector.shape_cast %72 : vector<1x4x32xf32> to vector<1x128xf32>
    %c0_37 = arith.constant 0 : index
    %c0_38 = arith.constant 0 : index
    %74 = vector.load %arg8[%c0_37, %c0_38] : memref<128x64xf32, #tpu.memory_space<vmem>>, vector<128x64xf32>
    %cst_39 = arith.constant dense<0.000000e+00> : vector<1x64xf32>
    %75 = tpu.matmul %73, %74, %cst_39 {dimension_numbers = #tpu.dot_dimension_numbers<[1], [0], [0], [1], [0, 0, 1, 1], [], []>} : vector<1x128xf32>, vector<128x64xf32>, vector<1x64xf32> -> vector<1x64xf32>
    %c0_40 = arith.constant 0 : index
    %c0_41 = arith.constant 0 : index
    %76 = vector.load %arg9[%c0_40, %c0_41] : memref<1x64xf32, #tpu.memory_space<vmem>>, vector<1x64xf32>
    %77 = arith.addf %75, %76 : vector<1x64xf32>
    %78 = arith.mulf %77, %77 : vector<1x64xf32>
    %cst_42 = arith.constant dense<0.000000e+00> : vector<1xf32>
    %79 = vector.multi_reduction <add>, %78, %cst_42 [1] : vector<1x64xf32> to vector<1xf32>
    %80 = vector.shape_cast %79 : vector<1xf32> to vector<1x1xf32>
    %cst_43 = arith.constant 1.000000e-24 : f32
    %81 = vector.broadcast %cst_43 : f32 to vector<1x1xf32>
    %82 = arith.maximumf %80, %81 : vector<1x1xf32>
    %83 = math.rsqrt %82 : vector<1x1xf32>
    %84 = vector.broadcast %83 : vector<1x1xf32> to vector<1x64xf32>
    %85 = arith.mulf %77, %84 : vector<1x64xf32>
    %c0_44 = arith.constant 0 : index
    %c0_45 = arith.constant 0 : index
    %86 = vector.load %arg10[%c0_44, %c0_45] : memref<64x128xf32, #tpu.memory_space<vmem>>, vector<64x128xf32>
    %cst_46 = arith.constant dense<0.000000e+00> : vector<1x128xf32>
    %87 = tpu.matmul %85, %86, %cst_46 {dimension_numbers = #tpu.dot_dimension_numbers<[1], [0], [0], [1], [0, 0, 1, 1], [], []>} : vector<1x64xf32>, vector<64x128xf32>, vector<1x128xf32> -> vector<1x128xf32>
    %c0_47 = arith.constant 0 : index
    %c0_48 = arith.constant 0 : index
    %c0_49 = arith.constant 0 : index
    %88 = vector.load %arg11[%c0_47, %c0_48, %c0_49] : memref<1x1x128xf32, #tpu.memory_space<vmem>>, vector<1x1x128xf32>
    %89 = vector.shape_cast %88 : vector<1x1x128xf32> to vector<1x128xf32>
    %90 = vector.shape_cast %87 : vector<1x128xf32> to vector<1x1x128xf32>
    tpu.vector_store %arg11[%c0_47, %c0_48, %c0_49], %90 {strides = array<i32>} : memref<1x1x128xf32, #tpu.memory_space<vmem>>, vector<1x1x128xf32>,
    return
  }
  func.func @transform_0(%arg0: i32) -> i32 {
    %c0_i32 = arith.constant 0 : i32
    %c0_i32_0 = arith.constant 0 : i32
    return %c0_i32 : i32
  }
  func.func @transform_1(%arg0: i32) -> i32 {
    %c0_i32 = arith.constant 0 : i32
    %c0_i32_0 = arith.constant 0 : i32
    return %c0_i32 : i32
  }
  func.func @transform_2(%arg0: i32) -> (i32, i32, i32, i32) {
    %c0_i32 = arith.constant 0 : i32
    %c0_i32_0 = arith.constant 0 : i32
    %c0_i32_1 = arith.constant 0 : i32
    %c0_i32_2 = arith.constant 0 : i32
    return %c0_i32, %arg0, %c0_i32_0, %c0_i32_1 : i32, i32, i32, i32
  }
  func.func @transform_3(%arg0: i32) -> (i32, i32) {
    %c0_i32 = arith.constant 0 : i32
    %c0_i32_0 = arith.constant 0 : i32
    %c0_i32_1 = arith.constant 0 : i32
    return %c0_i32, %c0_i32_0 : i32, i32
  }
  func.func @transform_4(%arg0: i32) -> (i32, i32) {
    %c0_i32 = arith.constant 0 : i32
    %c0_i32_0 = arith.constant 0 : i32
    %c0_i32_1 = arith.constant 0 : i32
    return %c0_i32, %c0_i32_0 : i32, i32
  }
  func.func @transform_5(%arg0: i32) -> (i32, i32) {
    %c0_i32 = arith.constant 0 : i32
    %c0_i32_0 = arith.constant 0 : i32
    %c0_i32_1 = arith.constant 0 : i32
    return %c0_i32, %c0_i32_0 : i32, i32
  }
  func.func @transform_6(%arg0: i32) -> (i32, i32) {
    %c0_i32 = arith.constant 0 : i32
    %c0_i32_0 = arith.constant 0 : i32
    %c0_i32_1 = arith.constant 0 : i32
    return %c0_i32, %c0_i32_0 : i32, i32
  }
  func.func @transform_7(%arg0: i32) -> (i32, i32) {
    %c0_i32 = arith.constant 0 : i32
    %c0_i32_0 = arith.constant 0 : i32
    %c0_i32_1 = arith.constant 0 : i32
    return %c0_i32, %c0_i32_0 : i32, i32
  }
  func.func @transform_8(%arg0: i32) -> (i32, i32) {
    %c0_i32 = arith.constant 0 : i32
    %c0_i32_0 = arith.constant 0 : i32
    %c0_i32_1 = arith.constant 0 : i32
    return %c0_i32, %c0_i32_0 : i32, i32
  }
  func.func @transform_9(%arg0: i32) -> (i32, i32) {
    %c0_i32 = arith.constant 0 : i32
    %c0_i32_0 = arith.constant 0 : i32
    %c0_i32_1 = arith.constant 0 : i32
    return %c0_i32, %c0_i32_0 : i32, i32
  }
  func.func @transform_10(%arg0: i32) -> (i32, i32, i32) {
    %c0_i32 = arith.constant 0 : i32
    %c0_i32_0 = arith.constant 0 : i32
    %c0_i32_1 = arith.constant 0 : i32
    return %arg0, %c0_i32, %c0_i32_0 : i32, i32, i32
  }
}

</mosaic_0001>

<llo_original>
// kernel: tpu_custom_call.1
$region0: #{tpu_custom_call.1}
  #allocation0 [shape = 'u32[]', space=smem, size = 0x4, offset = 0x4, fixed_abs, tag = 'smem constant byte address 0x4 - core index']
  #allocation1 [shape = 'u32[72,128]{1,0:T(1,128)}', space=vmem, size = 0x9000, scoped, tag = 'internal scratch']
  #allocation10 [shape = 's32[]', space=sflag, size = 0x4, offset = 0, fixed_abs, tag = 'sflag constant byte address 0x0 - dummy sync flag']
  %s0 = inlined_call_operand.vmem [shape: f32[5], index: 0, kind: input, shape index: {}]
  %s1 = inlined_call_operand.vmem [shape: f32[5], index: 1, kind: input, shape index: {}]
  %s2 = inlined_call_operand.hbm [shape: f32[5,4,16,64], index: 2, kind: input, shape index: {}]
  %s3 = inlined_call_operand.vmem [shape: f32[64,32], index: 3, kind: input, shape index: {}]
  %s4 = inlined_call_operand.vmem [shape: f32[1,32], index: 4, kind: input, shape index: {}]
  %s5 = inlined_call_operand.vmem [shape: f32[64,4], index: 5, kind: input, shape index: {}]
  %s6 = inlined_call_operand.vmem [shape: f32[1,4], index: 6, kind: input, shape index: {}]
  %s7 = inlined_call_operand.vmem [shape: f32[128,64], index: 7, kind: input, shape index: {}]
  %s8 = inlined_call_operand.vmem [shape: f32[1,64], index: 8, kind: input, shape index: {}]
  %s9 = inlined_call_operand.vmem [shape: f32[64,128], index: 9, kind: input, shape index: {}]
  %s10 = inlined_call_operand.hbm [shape: f32[4,1,128], index: 10, kind: output, shape index: {}]
  %s11 = sld [smem:[#allocation0]]
  $region85: #{tpu_custom_call.1} parent=0
    _
  %s13 = ssub.s32 1, %s11
  %s14 = scalar_select 0, %s13, %s11
  $region1: #{tpu_custom_call.1} parent=0
    #allocation2 [shape = 'u8[512]{0}', space=smem, size = 0x200, scoped, tag = 'input window, operand 0, single buffered']
    #allocation3 [shape = 's32[2]{0}', space=sflag, size = 0x8, scoped, tag = 'scoped memory for tpu_custom_call.1']
    #allocation4 [shape = 's32[2]{0}', space=sflag, size = 0x8, scoped, tag = 'scoped memory for tpu_custom_call.1']
    #allocation5 [shape = 's32[2]{0}', space=sflag, size = 0x8, scoped, tag = 'scoped memory for tpu_custom_call.1']
    #allocation6 [shape = 'u8[512]{0}', space=smem, size = 0x200, scoped, tag = 'input window, operand 1, single buffered']
    #allocation7 [shape = 's32[1]{0}', space=sflag, size = 0x4, scoped, tag = 'scoped memory for tpu_custom_call.1']
    #allocation8 [shape = 'u8[81920]{0}', space=vmem, size = 0x14000, scoped, tag = 'input window, operand 2']
    #allocation9 [shape = 'u8[1024]{0}', space=vmem, size = 0x400, scoped, tag = 'output window, operand 0']
    %15 = vsyncpa [#allocation5], 0
    %16 = vsyncpa [#allocation7], 0
    %17 = vsyncpa [#allocation3], 0
    %s18 = scalar_lea.sflag [#allocation3], 1
    %19 = vsyncpa %s18, 0
    %20 = vsyncpa [#allocation4], 0
    %s21 = scalar_lea.sflag [#allocation4], 1
    %22 = vsyncpa %s21, 0
    loop: start=0, step=1, limit=6
    $region2: #{tpu_custom_call.1} parent=1 // loop_pre_header
      _
    $region3: #{tpu_custom_call.1} parent=1 // loop_header
      %s24 = sphi 0, %s28
      %p25 = scmp.ge.s32.totalorder %s24, 6
      %s32 = sphi 0, %s32
      %s34 = sphi 0, %s32
      %s35 = sphi 0, %s34
      %s49 = sphi 0, %s35
      %s53 = sphi 0, %s53
      %s55 = sphi 0, %s53
      %s56 = sphi 0, %s55
      %s70 = sphi 0, %s56
      %s76 = sphi 0, %s78
      %s79 = sphi 0, %s76
      %s80 = sphi 0, %s79
      %s96 = sphi 0, %s80
      %s100 = sphi 0, %s100
      %s102 = sphi 0, %s100
      %s103 = sphi 0, %s102
      %s117 = sphi 0, %s103
      %s121 = sphi 0, %s121
      %s123 = sphi 0, %s121
      %s124 = sphi 0, %s123
      %s138 = sphi 0, %s124
      %s142 = sphi 0, %s142
      %s144 = sphi 0, %s142
      %s145 = sphi 0, %s144
      %s159 = sphi 0, %s145
      %s163 = sphi 0, %s163
      %s165 = sphi 0, %s163
      %s166 = sphi 0, %s165
      %s180 = sphi 0, %s166
      %s184 = sphi 0, %s184
      %s186 = sphi 0, %s184
      %s187 = sphi 0, %s186
      %s201 = sphi 0, %s187
      %s205 = sphi 0, %s205
      %s207 = sphi 0, %s205
      %s208 = sphi 0, %s207
      %s222 = sphi 0, %s208
      %s226 = sphi 0, %s226
      %s228 = sphi 0, %s226
      %s229 = sphi 0, %s228
      %s243 = sphi 0, %s229
      %s249 = sphi 0, %s251
      %s252 = sphi 0, %s249
      %s253 = sphi 0, %s252
      %s269 = sphi 0, %s253
    $region4: #{tpu_custom_call.1} parent=1 // loop_header_branch
      %27 = sbr.rel (%p25) target = $region8
    $region5: #{tpu_custom_call.1} parent=1 // loop_body
      %s29 = ssub.s32 %s24, 1
      %s30 = ssub.s32 %s24, 2
      %s31 = sadd.s32 %s24, 1
      %s33 = sadd.s32 %s32, 1
      %p36 = scmp.eq.s32.totalorder %s24, 3
      %p37 = scmp.ne.s32.totalorder %s32, %s34
      %p38 = scmp.eq.s32.totalorder %s24, 0
      %p39 = por %p37, %p38
      %p40 = scmp.ne.s32.totalorder %s32, %s34
      %p41 = scmp.eq.s32.totalorder %s29, 3
      %p42 = por %p40, %p41
      %p43 = scmp.ne.s32.totalorder %s34, %s35
      %p44 = scmp.eq.s32.totalorder %s29, 0
      %p45 = por %p43, %p44
      %p46 = scmp.ne.s32.totalorder %s34, %s35
      %p47 = scmp.eq.s32.totalorder %s30, 3
      %p48 = por %p46, %p47
      %p50 = scmp.ne.s32.totalorder %s35, %s49
      %p51 = scmp.eq.s32.totalorder %s30, 0
      %p52 = por %p50, %p51
      %s54 = sadd.s32 %s53, 1
      %p57 = scmp.eq.s32.totalorder %s24, 3
      %p58 = scmp.ne.s32.totalorder %s53, %s55
      %p59 = scmp.eq.s32.totalorder %s24, 0
      %p60 = por %p58, %p59
      %p61 = scmp.ne.s32.totalorder %s53, %s55
      %p62 = scmp.eq.s32.totalorder %s29, 3
      %p63 = por %p61, %p62
      %p64 = scmp.ne.s32.totalorder %s55, %s56
      %p65 = scmp.eq.s32.totalorder %s29, 0
      %p66 = por %p64, %p65
      %p67 = scmp.ne.s32.totalorder %s55, %s56
      %p68 = scmp.eq.s32.totalorder %s30, 3
      %p69 = por %p67, %p68
      %p71 = scmp.ne.s32.totalorder %s56, %s70
      %p72 = scmp.eq.s32.totalorder %s30, 0
      %p73 = por %p71, %p72
      %s74 = ssub.s32 %s24, %s31
      %p75 = scmp.eq.s32.totalorder %s74, 0
      %s77 = sadd.s32 %s76, 1
      %s78 = scalar_select %p75, %s76, %s77
      %p81 = pneg %p75
      %p82 = scmp.eq.s32.totalorder %s24, 3
      %p83 = por %p81, %p82
      %p84 = scmp.ne.s32.totalorder %s76, %s79
      %p85 = scmp.eq.s32.totalorder %s24, 0
      %p86 = por %p84, %p85
      %p87 = scmp.ne.s32.totalorder %s76, %s79
      %p88 = scmp.eq.s32.totalorder %s29, 3
      %p89 = por %p87, %p88
      %p90 = scmp.ne.s32.totalorder %s79, %s80
      %p91 = scmp.eq.s32.totalorder %s29, 0
      %p92 = por %p90, %p91
      %p93 = scmp.ne.s32.totalorder %s79, %s80
      %p94 = scmp.eq.s32.totalorder %s30, 3
      %p95 = por %p93, %p94
      %p97 = scmp.ne.s32.totalorder %s80, %s96
      %p98 = scmp.eq.s32.totalorder %s30, 0
      %p99 = por %p97, %p98
      %s101 = sadd.s32 %s100, 1
      %p104 = scmp.eq.s32.totalorder %s24, 3
      %p105 = scmp.ne.s32.totalorder %s100, %s102
      %p106 = scmp.eq.s32.totalorder %s24, 0
      %p107 = por %p105, %p106
      %p108 = scmp.ne.s32.totalorder %s100, %s102
      %p109 = scmp.eq.s32.totalorder %s29, 3
      %p110 = por %p108, %p109
      %p111 = scmp.ne.s32.totalorder %s102, %s103
      %p112 = scmp.eq.s32.totalorder %s29, 0
      %p113 = por %p111, %p112
      %p114 = scmp.ne.s32.totalorder %s102, %s103
      %p115 = scmp.eq.s32.totalorder %s30, 3
      %p116 = por %p114, %p115
      %p118 = scmp.ne.s32.totalorder %s103, %s117
      %p119 = scmp.eq.s32.totalorder %s30, 0
      %p120 = por %p118, %p119
      %s122 = sadd.s32 %s121, 1
      %p125 = scmp.eq.s32.totalorder %s24, 3
      %p126 = scmp.ne.s32.totalorder %s121, %s123
      %p127 = scmp.eq.s32.totalorder %s24, 0
      %p128 = por %p126, %p127
      %p129 = scmp.ne.s32.totalorder %s121, %s123
      %p130 = scmp.eq.s32.totalorder %s29, 3
      %p131 = por %p129, %p130
      %p132 = scmp.ne.s32.totalorder %s123, %s124
      %p133 = scmp.eq.s32.totalorder %s29, 0
      %p134 = por %p132, %p133
      %p135 = scmp.ne.s32.totalorder %s123, %s124
      %p136 = scmp.eq.s32.totalorder %s30, 3
      %p137 = por %p135, %p136
      %p139 = scmp.ne.s32.totalorder %s124, %s138
      %p140 = scmp.eq.s32.totalorder %s30, 0
      %p141 = por %p139, %p140
      %s143 = sadd.s32 %s142, 1
      %p146 = scmp.eq.s32.totalorder %s24, 3
      %p147 = scmp.ne.s32.totalorder %s142, %s144
      %p148 = scmp.eq.s32.totalorder %s24, 0
      %p149 = por %p147, %p148
      %p150 = scmp.ne.s32.totalorder %s142, %s144
      %p151 = scmp.eq.s32.totalorder %s29, 3
      %p152 = por %p150, %p151
      %p153 = scmp.ne.s32.totalorder %s144, %s145
      %p154 = scmp.eq.s32.totalorder %s29, 0
      %p155 = por %p153, %p154
      %p156 = scmp.ne.s32.totalorder %s144, %s145
      %p157 = scmp.eq.s32.totalorder %s30, 3
      %p158 = por %p156, %p157
      %p160 = scmp.ne.s32.totalorder %s145, %s159
      %p161 = scmp.eq.s32.totalorder %s30, 0
      %p162 = por %p160, %p161
      %s164 = sadd.s32 %s163, 1
      %p167 = scmp.eq.s32.totalorder %s24, 3
      %p168 = scmp.ne.s32.totalorder %s163, %s165
      %p169 = scmp.eq.s32.totalorder %s24, 0
      %p170 = por %p168, %p169
      %p171 = scmp.ne.s32.totalorder %s163, %s165
      %p172 = scmp.eq.s32.totalorder %s29, 3
      %p173 = por %p171, %p172
      %p174 = scmp.ne.s32.totalorder %s165, %s166
      %p175 = scmp.eq.s32.totalorder %s29, 0
      %p176 = por %p174, %p175
      %p177 = scmp.ne.s32.totalorder %s165, %s166
      %p178 = scmp.eq.s32.totalorder %s30, 3
      %p179 = por %p177, %p178
      %p181 = scmp.ne.s32.totalorder %s166, %s180
      %p182 = scmp.eq.s32.totalorder %s30, 0
      %p183 = por %p181, %p182
      %s185 = sadd.s32 %s184, 1
      %p188 = scmp.eq.s32.totalorder %s24, 3
      %p189 = scmp.ne.s32.totalorder %s184, %s186
      %p190 = scmp.eq.s32.totalorder %s24, 0
      %p191 = por %p189, %p190
      %p192 = scmp.ne.s32.totalorder %s184, %s186
      %p193 = scmp.eq.s32.totalorder %s29, 3
      %p194 = por %p192, %p193
      %p195 = scmp.ne.s32.totalorder %s186, %s187
      %p196 = scmp.eq.s32.totalorder %s29, 0
      %p197 = por %p195, %p196
      %p198 = scmp.ne.s32.totalorder %s186, %s187
      %p199 = scmp.eq.s32.totalorder %s30, 3
      %p200 = por %p198, %p199
      %p202 = scmp.ne.s32.totalorder %s187, %s201
      %p203 = scmp.eq.s32.totalorder %s30, 0
      %p204 = por %p202, %p203
      %s206 = sadd.s32 %s205, 1
      %p209 = scmp.eq.s32.totalorder %s24, 3
      %p210 = scmp.ne.s32.totalorder %s205, %s207
      %p211 = scmp.eq.s32.totalorder %s24, 0
      %p212 = por %p210, %p211
      %p213 = scmp.ne.s32.totalorder %s205, %s207
      %p214 = scmp.eq.s32.totalorder %s29, 3
      %p215 = por %p213, %p214
      %p216 = scmp.ne.s32.totalorder %s207, %s208
      %p217 = scmp.eq.s32.totalorder %s29, 0
      %p218 = por %p216, %p217
      %p219 = scmp.ne.s32.totalorder %s207, %s208
      %p220 = scmp.eq.s32.totalorder %s30, 3
      %p221 = por %p219, %p220
      %p223 = scmp.ne.s32.totalorder %s208, %s222
      %p224 = scmp.eq.s32.totalorder %s30, 0
      %p225 = por %p223, %p224
      %s227 = sadd.s32 %s226, 1
      %p230 = scmp.eq.s32.totalorder %s24, 3
      %p231 = scmp.ne.s32.totalorder %s226, %s228
      %p232 = scmp.eq.s32.totalorder %s24, 0
      %p233 = por %p231, %p232
      %p234 = scmp.ne.s32.totalorder %s226, %s228
      %p235 = scmp.eq.s32.totalorder %s29, 3
      %p236 = por %p234, %p235
      %p237 = scmp.ne.s32.totalorder %s228, %s229
      %p238 = scmp.eq.s32.totalorder %s29, 0
      %p239 = por %p237, %p238
      %p240 = scmp.ne.s32.totalorder %s228, %s229
      %p241 = scmp.eq.s32.totalorder %s30, 3
      %p242 = por %p240, %p241
      %p244 = scmp.ne.s32.totalorder %s229, %s243
      %p245 = scmp.eq.s32.totalorder %s30, 0
      %p246 = por %p244, %p245
      %s247 = ssub.s32 %s24, %s31
      %p248 = scmp.eq.s32.totalorder %s247, 0
      %s250 = sadd.s32 %s249, 1
      %s251 = scalar_select %p248, %s249, %s250
      %p254 = pneg %p248
      %p255 = scmp.eq.s32.totalorder %s24, 3
      %p256 = por %p254, %p255
      %p257 = scmp.ne.s32.totalorder %s249, %s252
      %p258 = scmp.eq.s32.totalorder %s24, 0
      %p259 = por %p257, %p258
      %p260 = scmp.ne.s32.totalorder %s249, %s252
      %p261 = scmp.eq.s32.totalorder %s29, 3
      %p262 = por %p260, %p261
      %p263 = scmp.ne.s32.totalorder %s252, %s253
      %p264 = scmp.eq.s32.totalorder %s29, 0
      %p265 = por %p263, %p264
      %p266 = scmp.ne.s32.totalorder %s252, %s253
      %p267 = scmp.eq.s32.totalorder %s30, 3
      %p268 = por %p266, %p267
      %p270 = scmp.ne.s32.totalorder %s253, %s269
      %p271 = scmp.eq.s32.totalorder %s30, 0
      %p272 = por %p270, %p271
      %p273 = scmp.le.s32.totalorder 1, %s24
      %p274 = scmp.lt.s32.totalorder %s24, 5
      %p275 = pnand %p273, %p274
      %p276 = pneg %p275
      // Predicated region
      $region9: #{tpu_custom_call.1} parent=5 // pred_check
        _
      $region10: #{tpu_custom_call.1} parent=5 // pred_check_branch
        %278 = sbr.rel (%p275) target = $region12
      $region11: #{tpu_custom_call.1} parent=5 // pred_region
        %s279 = ssub.s32 %s24, 1
        // Predicated region
        $region13: #{tpu_custom_call.1} parent=11 // pred_check
          %p280 = pneg %p45
        $region14: #{tpu_custom_call.1} parent=11 // pred_check_branch
          %282 = sbr.rel (%p280) target = $region16
        $region15: #{tpu_custom_call.1} parent=11 // pred_region
          %284 = vsyncadd [#allocation5], 0
          %s286 = sshll.u32 %s0, 4
          %s287 = int_to_ptr.vmem [resolvable:$true] %s286
          %289 = dma.vmem_to_smem %s287, 16, [#allocation2], [#allocation5]
        $region16: #{tpu_custom_call.1} parent=11 // pred_fallthru
          _
        // Predicated region
        $region17: #{tpu_custom_call.1} parent=11 // pred_check
          %p290 = pneg %p66
        $region18: #{tpu_custom_call.1} parent=11 // pred_check_branch
          %292 = sbr.rel (%p290) target = $region20
        $region19: #{tpu_custom_call.1} parent=11 // pred_region
          %294 = vsyncadd [#allocation7], 0
          %s296 = sshll.u32 %s1, 4
          %s297 = int_to_ptr.vmem [resolvable:$true] %s296
          %299 = dma.vmem_to_smem %s297, 16, [#allocation6], [#allocation7]
        $region20: #{tpu_custom_call.1} parent=11 // pred_fallthru
          _
        // Predicated region
        $region21: #{tpu_custom_call.1} parent=11 // pred_check
          %p300 = pneg %p113
        $region22: #{tpu_custom_call.1} parent=11 // pred_check_branch
          %302 = sbr.rel (%p300) target = $region24
        $region23: #{tpu_custom_call.1} parent=11 // pred_region
          _
        $region24: #{tpu_custom_call.1} parent=11 // pred_fallthru
          _
        // Predicated region
        $region25: #{tpu_custom_call.1} parent=11 // pred_check
          %p303 = pneg %p134
        $region26: #{tpu_custom_call.1} parent=11 // pred_check_branch
          %305 = sbr.rel (%p303) target = $region28
        $region27: #{tpu_custom_call.1} parent=11 // pred_region
          _
        $region28: #{tpu_custom_call.1} parent=11 // pred_fallthru
          _
        // Predicated region
        $region29: #{tpu_custom_call.1} parent=11 // pred_check
          %p306 = pneg %p155
        $region30: #{tpu_custom_call.1} parent=11 // pred_check_branch
          %308 = sbr.rel (%p306) target = $region32
        $region31: #{tpu_custom_call.1} parent=11 // pred_region
          _
        $region32: #{tpu_custom_call.1} parent=11 // pred_fallthru
          _
        // Predicated region
        $region33: #{tpu_custom_call.1} parent=11 // pred_check
          %p309 = pneg %p176
        $region34: #{tpu_custom_call.1} parent=11 // pred_check_branch
          %311 = sbr.rel (%p309) target = $region36
        $region35: #{tpu_custom_call.1} parent=11 // pred_region
          _
        $region36: #{tpu_custom_call.1} parent=11 // pred_fallthru
          _
        // Predicated region
        $region37: #{tpu_custom_call.1} parent=11 // pred_check
          %p312 = pneg %p197
        $region38: #{tpu_custom_call.1} parent=11 // pred_check_branch
          %314 = sbr.rel (%p312) target = $region40
        $region39: #{tpu_custom_call.1} parent=11 // pred_region
          _
        $region40: #{tpu_custom_call.1} parent=11 // pred_fallthru
          _
        // Predicated region
        $region41: #{tpu_custom_call.1} parent=11 // pred_check
          %p315 = pneg %p218
        $region42: #{tpu_custom_call.1} parent=11 // pred_check_branch
          %317 = sbr.rel (%p315) target = $region44
        $region43: #{tpu_custom_call.1} parent=11 // pred_region
          _
        $region44: #{tpu_custom_call.1} parent=11 // pred_fallthru
          _
        // Predicated region
        $region45: #{tpu_custom_call.1} parent=11 // pred_check
          %p318 = pneg %p239
        $region46: #{tpu_custom_call.1} parent=11 // pred_check_branch
          %320 = sbr.rel (%p318) target = $region48
        $region47: #{tpu_custom_call.1} parent=11 // pred_region
          _
        $region48: #{tpu_custom_call.1} parent=11 // pred_fallthru
          _
      $region12: #{tpu_custom_call.1} parent=5 // pred_fallthru
        _
      %p321 = scmp.lt.s32.totalorder %s24, 4
      // Predicated region
      $region49: #{tpu_custom_call.1} parent=5 // pred_check
        %p322 = pneg %p321
      $region50: #{tpu_custom_call.1} parent=5 // pred_check_branch
        %324 = sbr.rel (%p322) target = $region52
      $region51: #{tpu_custom_call.1} parent=5 // pred_region
        // Predicated region
        $region53: #{tpu_custom_call.1} parent=51 // pred_check
          %p325 = pneg %p86
        $region54: #{tpu_custom_call.1} parent=51 // pred_check_branch
          %327 = sbr.rel (%p325) target = $region56
        $region55: #{tpu_custom_call.1} parent=51 // pred_region
          #allocation11 [shape = 'u32[6]{0}', space=smem, size = 0x18, scoped, tag = 'DMA stride descriptor']
          %s328 = sand.u32 %s76, 1
          %s329 = scalar_lea.sflag [#allocation3], %s328
          %s330 = sand.u32 %s76, 1
          %s331 = smul.addr %s330, 80
          %s332 = scalar_lea.vmem [#allocation8], %s331
          %334 = vsyncadd %s329, 0
          %s335 = smul.addr %s24, 2
          %s336 = smul.addr %s335, 8
          %s337 = scalar_lea.hbm %s2, %s336
          %s339 = sshll.u32 1, 14
          %s340 = sxor.u32 4294967295, %s339
          %s342 = sld [smem:[#allocation0]]
          %s343 = sadd.s32 2, %s342
          %s345 = sshll.u32 7, 26
          %s346 = sxor.u32 4294967295, %s345
          %s347 = sand.u32 0, %s346
          %s348 = sshll.u32 %s343, 26
          %s349 = sor.u32 %s347, %s348
          %s350 = sshll.u32 %s337, 4
          %s351 = int_to_ptr.hbm [resolvable:$true] %s350
          %s352 = sshll.u32 %s332, 4
          %s353 = int_to_ptr.vmem [resolvable:$true] %s352
          %359 = sst [smem:[#allocation11]] 1024
          %s360 = scalar_lea.smem [#allocation11], 1
          %361 = sst [smem:[%s360]] 256
          %s362 = scalar_lea.smem [#allocation11], 2
          %363 = sst [smem:[%s362]] 2
          %s364 = scalar_lea.smem [#allocation11], 3
          %365 = sst [smem:[%s364]] 128
          %s366 = scalar_lea.smem [#allocation11], 4
          %367 = sst [smem:[%s366]] 128
          %s368 = scalar_lea.smem [#allocation11], 5
          %369 = sst [smem:[%s368]] 8
          %371 = dma.general %s351, 1280, %s353, %s329, [#allocation10], [#allocation11], %s349, 0
        $region56: #{tpu_custom_call.1} parent=51 // pred_fallthru
          _
      $region52: #{tpu_custom_call.1} parent=5 // pred_fallthru
        _
      %p372 = scmp.le.s32.totalorder 1, %s24
      %p373 = scmp.lt.s32.totalorder %s24, 5
      %p374 = pnand %p372, %p373
      %p375 = pneg %p374
      // Predicated region
      $region57: #{tpu_custom_call.1} parent=5 // pred_check
        _
      $region58: #{tpu_custom_call.1} parent=5 // pred_check_branch
        %377 = sbr.rel (%p374) target = $region60
      $region59: #{tpu_custom_call.1} parent=5 // pred_region
        %s378 = ssub.s32 %s24, 1
        // Predicated region
        $region61: #{tpu_custom_call.1} parent=59 // pred_check
          %p379 = pneg %p45
        $region62: #{tpu_custom_call.1} parent=59 // pred_check_branch
          %381 = sbr.rel (%p379) target = $region64
        $region63: #{tpu_custom_call.1} parent=59 // pred_region
          %383 = dma.done [#allocation5], 16
        $region64: #{tpu_custom_call.1} parent=59 // pred_fallthru
          _
        // Predicated region
        $region65: #{tpu_custom_call.1} parent=59 // pred_check
          %p384 = pneg %p66
        $region66: #{tpu_custom_call.1} parent=59 // pred_check_branch
          %386 = sbr.rel (%p384) target = $region68
        $region67: #{tpu_custom_call.1} parent=59 // pred_region
          %388 = dma.done [#allocation7], 16
        $region68: #{tpu_custom_call.1} parent=59 // pred_fallthru
          _
        %s389 = sand.u32 %s79, 1
        %s390 = scalar_lea.sflag [#allocation3], %s389
        %s391 = sand.u32 %s79, 1
        %s392 = smul.addr %s391, 80
        %s393 = scalar_lea.vmem [#allocation8], %s392
        // Predicated region
        $region69: #{tpu_custom_call.1} parent=59 // pred_check
          %p394 = pneg %p92
        $region70: #{tpu_custom_call.1} parent=59 // pred_check_branch
          %396 = sbr.rel (%p394) target = $region72
        $region71: #{tpu_custom_call.1} parent=59 // pred_region
          %398 = dma.done %s390, 1280
        $region72: #{tpu_custom_call.1} parent=59 // pred_fallthru
          _
        %399 = sfence
        %p400 = pneg %p45
        %p401 = pneg %p42
        %p402 = pneg %p66
        %p403 = pneg %p63
        %s404 = sand.u32 %s79, 1
        %s405 = scalar_lea.sflag [#allocation3], %s404
        %s406 = sand.u32 %s79, 1
        %s407 = smul.addr %s406, 80
        %s408 = scalar_lea.vmem [#allocation8], %s407
        %p409 = pneg %p92
        %p410 = pneg %p89
        %p411 = pneg %p113
        %p412 = pneg %p110
        %p413 = pneg %p134
        %p414 = pneg %p131
        %p415 = pneg %p155
        %p416 = pneg %p152
        %p417 = pneg %p176
        %p418 = pneg %p173
        %p419 = pneg %p197
        %p420 = pneg %p194
        %p421 = pneg %p218
        %p422 = pneg %p215
        %p423 = pneg %p239
        %p424 = pneg %p236
        %p425 = pneg %p265
        %p426 = pneg %p262
        %s427 = sand.u32 %s252, 1
        %s428 = scalar_lea.sflag [#allocation4], %s427
        %s429 = sand.u32 %s252, 1
        %s430 = scalar_lea.vmem [#allocation9], %s429
        %v431 = vld [vmem:[%s393] sm:$0xff]
        %v432 = vld [vmem:[%s393 + $0x8] sm:$0xff]
        %s433 = sld [smem:[#allocation2]]
        %v434 = vstv %s433
        %v435 = vmul.f32 %v431, %v434
        %v436 = vmul.f32 %v432, %v434
        %s437 = sld [smem:[#allocation6]]
        %v438 = vstv %s437
        %v439 = vmul.f32 %v431, %v438
        %v440 = vmul.f32 %v432, %v438
        %s441 = scalar_lea.vmem %s393, 16 [#allocation8]
        %v442 = vld [vmem:[%s441] sm:$0xff]
        %v443 = vld [vmem:[%s441 + $0x8] sm:$0xff]
        %s444 = sld [smem:[#allocation2 + $0x1]]
        %v445 = vstv %s444
        %v446 = vmul.f32 %v442, %v445
        %v447 = vmul.f32 %v443, %v445
        %v448 = vadd.f32 %v435, %v446
        %v449 = vadd.f32 %v436, %v447
        %s450 = sld [smem:[#allocation6 + $0x1]]
        %v451 = vstv %s450
        %v452 = vmul.f32 %v442, %v451
        %v453 = vmul.f32 %v443, %v451
        %v454 = vadd.f32 %v439, %v452
        %v455 = vadd.f32 %v440, %v453
        %s456 = scalar_lea.vmem %s393, 32 [#allocation8]
        %v457 = vld [vmem:[%s456] sm:$0xff]
        %v458 = vld [vmem:[%s456 + $0x8] sm:$0xff]
        %s459 = sld [smem:[#allocation2 + $0x2]]
        %v460 = vstv %s459
        %v461 = vmul.f32 %v457, %v460
        %v462 = vmul.f32 %v458, %v460
        %v463 = vadd.f32 %v448, %v461
        %v464 = vadd.f32 %v449, %v462
        %s465 = sld [smem:[#allocation6 + $0x2]]
        %v466 = vstv %s465
        %v467 = vmul.f32 %v457, %v466
        %v468 = vmul.f32 %v458, %v466
        %v469 = vadd.f32 %v454, %v467
        %v470 = vadd.f32 %v455, %v468
        %s471 = scalar_lea.vmem %s393, 48 [#allocation8]
        %v472 = vld [vmem:[%s471] sm:$0xff]
        %v473 = vld [vmem:[%s471 + $0x8] sm:$0xff]
        %s474 = sld [smem:[#allocation2 + $0x3]]
        %v475 = vstv %s474
        %v476 = vmul.f32 %v472, %v475
        %v477 = vmul.f32 %v473, %v475
        %v478 = vadd.f32 %v463, %v476
        %v479 = vadd.f32 %v464, %v477
        %s480 = sld [smem:[#allocation6 + $0x3]]
        %v481 = vstv %s480
        %v482 = vmul.f32 %v472, %v481
        %v483 = vmul.f32 %v473, %v481
        %v484 = vadd.f32 %v469, %v482
        %v485 = vadd.f32 %v470, %v483
        %s486 = scalar_lea.vmem %s393, 64 [#allocation8]
        %v487 = vld [vmem:[%s486] sm:$0xff]
        %v488 = vld [vmem:[%s486 + $0x8] sm:$0xff]
        %s489 = sld [smem:[#allocation2 + $0x4]]
        %v490 = vstv %s489
        %v491 = vmul.f32 %v487, %v490
        %v492 = vmul.f32 %v488, %v490
        %v493 = vadd.f32 %v478, %v491
        %v494 = vadd.f32 %v479, %v492
        %s495 = sld [smem:[#allocation6 + $0x4]]
        %v496 = vstv %s495
        %v497 = vmul.f32 %v487, %v496
        %v498 = vmul.f32 %v488, %v496
        %v499 = vadd.f32 %v484, %v497
        %v500 = vadd.f32 %v485, %v498
        %v501 = vld [vmem:[%s5] sm:$0xff]
        %v502 = vld [vmem:[%s5 + $0x8] sm:$0xff]
        %v503 = vld [vmem:[%s5 + $0x10] sm:$0xff]
        %v504 = vld [vmem:[%s5 + $0x18] sm:$0xff]
        %v505 = vld [vmem:[%s5 + $0x20] sm:$0xff]
        %v506 = vld [vmem:[%s5 + $0x28] sm:$0xff]
        %v507 = vld [vmem:[%s5 + $0x30] sm:$0xff]
        %v508 = vld [vmem:[%s5 + $0x38] sm:$0xff]
        %v509 = vld [vmem:[%s6] sm:$0x1]
        %v511 = vperm.slane %v509, 0
        %vm513 = vcmask 523264
        %v515 = vsel %vm513, %v493, 0
        %v518 = vsel %vm513, %v494, 0
        %520 = vmatpush.msra.mxu0 0.0
        %521 = vmatpush.msra.mxu0 0.0
        %522 = vmatpush.msra.mxu0 0.0
        %523 = vmatpush.msra.mxu0 0.0
        %524 = vmatpush.msra.mxu0 0.0
        %525 = vmatpush.msra.mxu0 0.0
        %526 = vmatpush.msra.mxu0 0.0
        %527 = vmatpush.msra.mxu0 0.0
        %528 = vmatpush.msra.mxu0 %v508
        %529 = vmatpush.msra.mxu0 %v507
        %530 = vmatpush.msra.mxu0 %v506
        %531 = vmatpush.msra.mxu0 %v505
        %532 = vmatpush.msra.mxu0 %v504
        %533 = vmatpush.msra.mxu0 %v503
        %534 = vmatpush.msra.mxu0 %v502
        %535 = vmatpush.msra.mxu0 %v501
        %536 = vmatmul.f32.gmra.mxu0 %v515
        %v537 = vpop.f32.mrf.mxu0
        %v538 = vadd.f32 %v511, %v537
        %539 = vmatmul.f32.gmra.mxu0 %v518
        %v540 = vpop.f32.mrf.mxu0
        %v541 = vadd.f32 %v511, %v540
        %542 = vdwg.mxu0
        %v543 = vld [vmem:[%s3] sm:$0xff]
        %v544 = vld [vmem:[%s3 + $0x8] sm:$0xff]
        %v545 = vld [vmem:[%s3 + $0x10] sm:$0xff]
        %v546 = vld [vmem:[%s3 + $0x18] sm:$0xff]
        %v547 = vld [vmem:[%s3 + $0x20] sm:$0xff]
        %v548 = vld [vmem:[%s3 + $0x28] sm:$0xff]
        %v549 = vld [vmem:[%s3 + $0x30] sm:$0xff]
        %v550 = vld [vmem:[%s3 + $0x38] sm:$0xff]
        %v551 = vld [vmem:[%s4] sm:$0x1]
        %v553 = vperm.slane %v551, 0
        %v556 = vsel %vm513, %v499, 0
        %v559 = vsel %vm513, %v500, 0
        %561 = vmatpush.msra.mxu0 0.0
        %562 = vmatpush.msra.mxu0 0.0
        %563 = vmatpush.msra.mxu0 0.0
        %564 = vmatpush.msra.mxu0 0.0
        %565 = vmatpush.msra.mxu0 0.0
        %566 = vmatpush.msra.mxu0 0.0
        %567 = vmatpush.msra.mxu0 0.0
        %568 = vmatpush.msra.mxu0 0.0
        %569 = vmatpush.msra.mxu0 %v550
        %570 = vmatpush.msra.mxu0 %v549
        %571 = vmatpush.msra.mxu0 %v548
        %572 = vmatpush.msra.mxu0 %v547
        %573 = vmatpush.msra.mxu0 %v546
        %574 = vmatpush.msra.mxu0 %v545
        %575 = vmatpush.msra.mxu0 %v544
        %576 = vmatpush.msra.mxu0 %v543
        %577 = vmatmul.f32.gmra.mxu0 %v556
        %v578 = vpop.f32.mrf.mxu0
        %v579 = vadd.f32 %v553, %v578
        %580 = vmatmul.f32.gmra.mxu0 %v559
        %v581 = vpop.f32.mrf.mxu0
        %v582 = vadd.f32 %v553, %v581
        %583 = vdwg.mxu0
        %vm584 = vcmask 31744
        %v585 = vsel %vm584, %v538, -inf
        %v586 = vsel %vm584, %v541, -inf
        %v587 = vmax.f32 %v585, %v586
        %v588 = vrot.slane %v587, 4
        %v589 = vmax.f32 %v587, %v588
        %v590 = vrot.slane %v589, 2
        %v591 = vmax.f32 %v589, %v590
        %v592 = vrot.slane %v591, 1
        %v593 = vmax.f32 %v591, %v592
        %v594 = vsub.f32 %v538, %v593
        %v595 = vsub.f32 %v541, %v593
        %v596 = vmul.f32 %v594, 1.442695
        %v597 = vpow.pop %v596
        %v598 = vmul.f32 %v595, 1.442695
        %v599 = vpow.pop %v598
        %v600 = vsel %vm584, %v597, 0.0
        %v601 = vsel %vm584, %v599, 0.0
        %v602 = vadd.f32 %v600, %v601
        %v603 = vrot.slane %v602, 4
        %v604 = vadd.f32 %v602, %v603
        %v605 = vrot.slane %v604, 2
        %v606 = vadd.f32 %v604, %v605
        %v607 = vrot.slane %v606, 1
        %v608 = vadd.f32 %v606, %v607
        %v609 = vrcp.pop %v608
        %v610 = vmul.f32 %v597, %v609
        %v611 = vmul.f32 %v599, %v609
        %612 = vxpose.xlu0.b32.start [1/16] %v610, 128
        %613 = vxpose.xlu0.b32.cont [2/16] %v611, 128
        %614 = vxpose.xlu0.b32.cont [3/16] 0.0, 128
        %615 = vxpose.xlu0.b32.cont [4/16] 0.0, 128
        %616 = vxpose.xlu0.b32.cont [5/16] 0.0, 128
        %617 = vxpose.xlu0.b32.cont [6/16] 0.0, 128
        %618 = vxpose.xlu0.b32.cont [7/16] 0.0, 128
        %619 = vxpose.xlu0.b32.cont [8/16] 0.0, 128
        %620 = vxpose.xlu0.b32.cont [9/16] 0.0, 128
        %621 = vxpose.xlu0.b32.cont [10/16] 0.0, 128
        %622 = vxpose.xlu0.b32.cont [11/16] 0.0, 128
        %623 = vxpose.xlu0.b32.cont [12/16] 0.0, 128
        %624 = vxpose.xlu0.b32.cont [13/16] 0.0, 128
        %625 = vxpose.xlu0.b32.cont [14/16] 0.0, 128
        %626 = vxpose.xlu0.b32.cont [15/16] 0.0, 128
        %627 = vxpose.xlu0.b32.end [16/16] 0.0, 128
        %v628 = vpop.trf.xlu0
        %v629 = vpop.trf.xlu0
        %v630 = vpop.trf.xlu0
        %v631 = vpop.trf.xlu0
        %v632 = vpop.trf.xlu0
        %v633 = vpop.trf.xlu0
        %v634 = vpop.trf.xlu0
        %v635 = vpop.trf.xlu0
        %v636 = vpop.trf.xlu0
        %v637 = vpop.trf.xlu0
        %v638 = vpop.trf.xlu0
        %v639 = vpop.trf.xlu0
        %v640 = vpop.trf.xlu0
        %v641 = vpop.trf.xlu0
        %v642 = vpop.trf.xlu0
        %v643 = vpop.trf.xlu0
        %vm644 = vcmask 130048
        %v646 = vsel %vm644, %v628, 0
        %648 = vmatpush.msra.mxu0 0.0
        %649 = vmatpush.msra.mxu0 0.0
        %650 = vmatpush.msra.mxu0 0.0
        %651 = vmatpush.msra.mxu0 0.0
        %652 = vmatpush.msra.mxu0 0.0
        %653 = vmatpush.msra.mxu0 0.0
        %654 = vmatpush.msra.mxu0 0.0
        %655 = vmatpush.msra.mxu0 0.0
        %656 = vmatpush.msra.mxu0 0.0
        %657 = vmatpush.msra.mxu0 0.0
        %658 = vmatpush.msra.mxu0 0.0
        %659 = vmatpush.msra.mxu0 0.0
        %660 = vmatpush.msra.mxu0 0.0
        %661 = vmatpush.msra.mxu0 0.0
        %662 = vmatpush.msra.mxu0 %v582
        %663 = vmatpush.msra.mxu0 %v579
        %664 = vmatmul.f32.gmra.mxu0 %v646
        %v665 = vpop.f32.mrf.mxu0
        %v666 = vadd.f32 0.0, %v665
        %667 = vdwg.mxu0
        %v669 = vunpack.c.l.s4 1983009808
        %v670 = vunpack.c.0.s8 %v669
        %v671 = vperm.slane %v666, %v670
        %v672 = vrot.slane %v671, 4
        %vm673 = vcmask 1047556
        %v674 = vsel %vm673, 0.0, %v672
        %v676 = vunpack.c.l.s4 1934713408
        %v677 = vunpack.c.0.s8 %v676
        %v678 = vperm.slane %v671, %v677
        %v680 = vunpack.c.l.s4 1934713408
        %v681 = vunpack.c.0.s8 %v680
        %v682 = vperm.slane %v674, %v681
        %v683 = vrot.slane %v678, 4
        %v684 = vsel %vm673, 0.0, %v683
        %v685 = vrot.slane %v682, 4
        %v686 = vsel %vm673, 0.0, %v685
        %688 = vrot.lane.b32.xlu0 %v684, 32
        %v689 = vpop.permute.xlu0 %688
        %692 = vrot.lane.b32.xlu0 %v682, 64
        %v693 = vpop.permute.xlu0 %692
        %696 = vrot.lane.b32.xlu0 %v686, 96
        %v697 = vpop.permute.xlu0 %696
        %vm699 = vcmask 261120
        %v700 = vsel %vm699, %v678, %v689
        %v701 = vsel %vm513, %v700, %v693
        %vm702 = vcmask 785408
        %v703 = vsel %vm702, %v701, %v697
        %v704 = vld [vmem:[%s7] sm:$0xff]
        %v705 = vld [vmem:[%s7 + $0x8] sm:$0xff]
        %v706 = vld [vmem:[%s7 + $0x10] sm:$0xff]
        %v707 = vld [vmem:[%s7 + $0x18] sm:$0xff]
        %v708 = vld [vmem:[%s7 + $0x20] sm:$0xff]
        %v709 = vld [vmem:[%s7 + $0x28] sm:$0xff]
        %v710 = vld [vmem:[%s7 + $0x30] sm:$0xff]
        %v711 = vld [vmem:[%s7 + $0x38] sm:$0xff]
        %v712 = vld [vmem:[%s7 + $0x40] sm:$0xff]
        %v713 = vld [vmem:[%s7 + $0x48] sm:$0xff]
        %v714 = vld [vmem:[%s7 + $0x50] sm:$0xff]
        %v715 = vld [vmem:[%s7 + $0x58] sm:$0xff]
        %v716 = vld [vmem:[%s7 + $0x60] sm:$0xff]
        %v717 = vld [vmem:[%s7 + $0x68] sm:$0xff]
        %v718 = vld [vmem:[%s7 + $0x70] sm:$0xff]
        %v719 = vld [vmem:[%s7 + $0x78] sm:$0xff]
        %v720 = vld [vmem:[%s8] sm:$0x1]
        %721 = vmatpush.msra.mxu0 %v719
        %722 = vmatpush.msra.mxu0 %v718
        %723 = vmatpush.msra.mxu0 %v717
        %724 = vmatpush.msra.mxu0 %v716
        %725 = vmatpush.msra.mxu0 %v715
        %726 = vmatpush.msra.mxu0 %v714
        %727 = vmatpush.msra.mxu0 %v713
        %728 = vmatpush.msra.mxu0 %v712
        %729 = vmatpush.msra.mxu0 %v711
        %730 = vmatpush.msra.mxu0 %v710
        %731 = vmatpush.msra.mxu0 %v709
        %732 = vmatpush.msra.mxu0 %v708
        %733 = vmatpush.msra.mxu0 %v707
        %734 = vmatpush.msra.mxu0 %v706
        %735 = vmatpush.msra.mxu0 %v705
        %736 = vmatpush.msra.mxu0 %v704
        %737 = vmatmul.f32.gmra.mxu0 %v703
        %v738 = vpop.f32.mrf.mxu0
        %v739 = vadd.f32 %v720, %v738
        %740 = vdwg.mxu0
        %v741 = vmul.f32 %v739, %v739
        %vm742 = vcmask 516096
        %v743 = vsel %vm742, %v741, 0.0
        %744 = vadd.xlane.f32.xlu0 %v743
        %v745 = vpop.xlane.xlu0 %744
        %v746 = vmax.f32 %v745, 1e-24
        %v747 = vrsqrt.pop %v746
        %v748 = vmul.f32 %v747, %v746
        %v749 = vmul.f32 %v748, %v747
        %v750 = vmul.f32 0.5, %v749
        %v751 = vsub.f32 1.5, %v750
        %v752 = vmul.f32 %v747, %v751
        %vm753 = vweird.f32 %v746
        %vm754 = vweird.f32 %v747
        %vm755 = vmor %vm753, %vm754
        %v756 = vsel %vm755, %v747, %v752
        %v757 = vmul.f32 %v739, %v756
        %v758 = vld [vmem:[%s9] sm:$0xff]
        %v759 = vld [vmem:[%s9 + $0x8] sm:$0xff]
        %v760 = vld [vmem:[%s9 + $0x10] sm:$0xff]
        %v761 = vld [vmem:[%s9 + $0x18] sm:$0xff]
        %v762 = vld [vmem:[%s9 + $0x20] sm:$0xff]
        %v763 = vld [vmem:[%s9 + $0x28] sm:$0xff]
        %v764 = vld [vmem:[%s9 + $0x30] sm:$0xff]
        %v765 = vld [vmem:[%s9 + $0x38] sm:$0xff]
        %v767 = vsel %vm513, %v757, 0
        %769 = vmatpush.msra.mxu0 0.0
        %770 = vmatpush.msra.mxu0 0.0
        %771 = vmatpush.msra.mxu0 0.0
        %772 = vmatpush.msra.mxu0 0.0
        %773 = vmatpush.msra.mxu0 0.0
        %774 = vmatpush.msra.mxu0 0.0
        %775 = vmatpush.msra.mxu0 0.0
        %776 = vmatpush.msra.mxu0 0.0
        %777 = vmatpush.msra.mxu0 %v765
        %778 = vmatpush.msra.mxu0 %v764
        %779 = vmatpush.msra.mxu0 %v763
        %780 = vmatpush.msra.mxu0 %v762
        %781 = vmatpush.msra.mxu0 %v761
        %782 = vmatpush.msra.mxu0 %v760
        %783 = vmatpush.msra.mxu0 %v759
        %784 = vmatpush.msra.mxu0 %v758
        %785 = vmatmul.f32.gmra.mxu0 %v767
        %v786 = vpop.f32.mrf.mxu0
        %v787 = vadd.f32 0.0, %v786
        %788 = vdwg.mxu0
        %789 = vst [vmem:[%s430] sm:$0x1] %v787
        %s790 = sand.u32 %s252, 1
        %s791 = scalar_lea.sflag [#allocation4], %s790
        %s792 = sand.u32 %s252, 1
        %s793 = scalar_lea.vmem [#allocation9], %s792
        // Predicated region
        $region73: #{tpu_custom_call.1} parent=59 // pred_check
          %p794 = pneg %p262
        $region74: #{tpu_custom_call.1} parent=59 // pred_check_branch
          %796 = sbr.rel (%p794) target = $region76
        $region75: #{tpu_custom_call.1} parent=59 // pred_region
          %798 = vsyncadd %s791, 0
          %s799 = scalar_lea.hbm %s10, %s29
          %s801 = sshll.u32 %s793, 4
          %s802 = int_to_ptr.vmem [resolvable:$true] %s801
          %s803 = sshll.u32 %s799, 4
          %s804 = int_to_ptr.hbm [resolvable:$true] %s803
          %806 = dma.vmem_to_hbm [thread:$0]  %s802, 16, %s804, %s791
        $region76: #{tpu_custom_call.1} parent=59 // pred_fallthru
          _
      $region60: #{tpu_custom_call.1} parent=5 // pred_fallthru
        _
      %p807 = scmp.le.s32.totalorder 2, %s24
      // Predicated region
      $region77: #{tpu_custom_call.1} parent=5 // pred_check
        %p808 = pneg %p807
      $region78: #{tpu_custom_call.1} parent=5 // pred_check_branch
        %810 = sbr.rel (%p808) target = $region80
      $region79: #{tpu_custom_call.1} parent=5 // pred_region
        %s811 = ssub.s32 %s24, 2
        // Predicated region
        $region81: #{tpu_custom_call.1} parent=79 // pred_check
          %p812 = pneg %p268
        $region82: #{tpu_custom_call.1} parent=79 // pred_check_branch
          %814 = sbr.rel (%p812) target = $region84
        $region83: #{tpu_custom_call.1} parent=79 // pred_region
          %s815 = sand.u32 %s253, 1
          %s816 = scalar_lea.sflag [#allocation4], %s815
          %s817 = sand.u32 %s253, 1
          %s818 = scalar_lea.vmem [#allocation9], %s817
          %820 = dma.done %s816, 16
        $region84: #{tpu_custom_call.1} parent=79 // pred_fallthru
          _
      $region80: #{tpu_custom_call.1} parent=5 // pred_fallthru
        _
    $region6: #{tpu_custom_call.1} parent=1 // loop_footer
      %s28 = sadd.s32 1, %s24
    $region7: #{tpu_custom_call.1} parent=1 // loop_footer_branch
      %23 = sbr.rel target = $region3
    $region8: #{tpu_custom_call.1} parent=1 // loop_exit
      _
    %821 = vsyncpa [#allocation3], 1
    %s822 = scalar_lea.sflag [#allocation3], 1
    %823 = vsyncpa %s822, 1
    %824 = vsyncpa [#allocation4], 1
    %s825 = scalar_lea.sflag [#allocation4], 1
    %826 = vsyncpa %s825, 1
    %827 = vsyncpa [#allocation5], 1
    %s828 = scalar_lea.sflag [#allocation5], 1
    %829 = vsyncpa %s828, 1
    %830 = vsyncpa [#allocation7], 1

// kernel: tpu_custom_call.1
$region0: #{tpu_custom_call.1}
  #allocation0 [shape = 'u32[]', space=smem, size = 0x4, offset = 0x4, fixed_abs, tag = 'smem constant byte address 0x4 - core index']
  #allocation1 [shape = 'u32[72,128]{1,0:T(1,128)}', space=vmem, size = 0x9000, scoped, tag = 'internal scratch']
  #allocation10 [shape = 's32[]', space=sflag, size = 0x4, offset = 0, fixed_abs, tag = 'sflag constant byte address 0x0 - dummy sync flag']
  %s0 = inlined_call_operand.vmem [shape: f32[5], index: 0, kind: input, shape index: {}]
  %s1 = inlined_call_operand.vmem [shape: f32[5], index: 1, kind: input, shape index: {}]
  %s2 = inlined_call_operand.hbm [shape: f32[5,4,16,64], index: 2, kind: input, shape index: {}]
  %s3 = inlined_call_operand.vmem [shape: f32[64,32], index: 3, kind: input, shape index: {}]
  %s4 = inlined_call_operand.vmem [shape: f32[1,32], index: 4, kind: input, shape index: {}]
  %s5 = inlined_call_operand.vmem [shape: f32[64,4], index: 5, kind: input, shape index: {}]
  %s6 = inlined_call_operand.vmem [shape: f32[1,4], index: 6, kind: input, shape index: {}]
  %s7 = inlined_call_operand.vmem [shape: f32[128,64], index: 7, kind: input, shape index: {}]
  %s8 = inlined_call_operand.vmem [shape: f32[1,64], index: 8, kind: input, shape index: {}]
  %s9 = inlined_call_operand.vmem [shape: f32[64,128], index: 9, kind: input, shape index: {}]
  %s10 = inlined_call_operand.hbm [shape: f32[4,1,128], index: 10, kind: output, shape index: {}]
  %s11 = sld [smem:[#allocation0]]
  $region85: #{tpu_custom_call.1} parent=0
    _
  %s13 = ssub.s32 1, %s11
  %s14 = scalar_select 0, %s13, %s11
  $region1: #{tpu_custom_call.1} parent=0
    #allocation2 [shape = 'u8[512]{0}', space=smem, size = 0x200, scoped, tag = 'input window, operand 0, single buffered']
    #allocation3 [shape = 's32[2]{0}', space=sflag, size = 0x8, scoped, tag = 'scoped memory for tpu_custom_call.1']
    #allocation4 [shape = 's32[2]{0}', space=sflag, size = 0x8, scoped, tag = 'scoped memory for tpu_custom_call.1']
    #allocation5 [shape = 's32[2]{0}', space=sflag, size = 0x8, scoped, tag = 'scoped memory for tpu_custom_call.1']
    #allocation6 [shape = 'u8[512]{0}', space=smem, size = 0x200, scoped, tag = 'input window, operand 1, single buffered']
    #allocation7 [shape = 's32[1]{0}', space=sflag, size = 0x4, scoped, tag = 'scoped memory for tpu_custom_call.1']
    #allocation8 [shape = 'u8[81920]{0}', space=vmem, size = 0x14000, scoped, tag = 'input window, operand 2']
    #allocation9 [shape = 'u8[1024]{0}', space=vmem, size = 0x400, scoped, tag = 'output window, operand 0']
    %15 = vsyncpa [#allocation5], 0
    %16 = vsyncpa [#allocation7], 0
    %17 = vsyncpa [#allocation3], 0
    %s18 = scalar_lea.sflag [#allocation3], 1
    %19 = vsyncpa %s18, 0
    %20 = vsyncpa [#allocation4], 0
    %s21 = scalar_lea.sflag [#allocation4], 1
    %22 = vsyncpa %s21, 0
    loop: start=0, step=1, limit=6
    $region2: #{tpu_custom_call.1} parent=1 // loop_pre_header
      _
    $region3: #{tpu_custom_call.1} parent=1 // loop_header
      %s24 = sphi 0, %s28
      %p25 = scmp.ge.s32.totalorder %s24, 6
      %s32 = sphi 0, %s32
      %s34 = sphi 0, %s32
      %s35 = sphi 0, %s34
      %s49 = sphi 0, %s35
      %s53 = sphi 0, %s53
      %s55 = sphi 0, %s53
      %s56 = sphi 0, %s55
      %s70 = sphi 0, %s56
      %s76 = sphi 0, %s78
      %s79 = sphi 0, %s76
      %s80 = sphi 0, %s79
      %s96 = sphi 0, %s80
      %s100 = sphi 0, %s100
      %s102 = sphi 0, %s100
      %s103 = sphi 0, %s102
      %s117 = sphi 0, %s103
      %s121 = sphi 0, %s121
      %s123 = sphi 0, %s121
      %s124 = sphi 0, %s123
      %s138 = sphi 0, %s124
      %s142 = sphi 0, %s142
      %s144 = sphi 0, %s142
      %s145 = sphi 0, %s144
      %s159 = sphi 0, %s145
      %s163 = sphi 0, %s163
      %s165 = sphi 0, %s163
      %s166 = sphi 0, %s165
      %s180 = sphi 0, %s166
      %s184 = sphi 0, %s184
      %s186 = sphi 0, %s184
      %s187 = sphi 0, %s186
      %s201 = sphi 0, %s187
      %s205 = sphi 0, %s205
      %s207 = sphi 0, %s205
      %s208 = sphi 0, %s207
      %s222 = sphi 0, %s208
      %s226 = sphi 0, %s226
      %s228 = sphi 0, %s226
      %s229 = sphi 0, %s228
      %s243 = sphi 0, %s229
      %s249 = sphi 0, %s251
      %s252 = sphi 0, %s249
      %s253 = sphi 0, %s252
      %s269 = sphi 0, %s253
    $region4: #{tpu_custom_call.1} parent=1 // loop_header_branch
      %27 = sbr.rel (%p25) target = $region8
    $region5: #{tpu_custom_call.1} parent=1 // loop_body
      %s29 = ssub.s32 %s24, 1
      %s30 = ssub.s32 %s24, 2
      %s31 = sadd.s32 %s24, 1
      %s33 = sadd.s32 %s32, 1
      %p36 = scmp.eq.s32.totalorder %s24, 3
      %p37 = scmp.ne.s32.totalorder %s32, %s34
      %p38 = scmp.eq.s32.totalorder %s24, 0
      %p39 = por %p37, %p38
      %p40 = scmp.ne.s32.totalorder %s32, %s34
      %p41 = scmp.eq.s32.totalorder %s29, 3
      %p42 = por %p40, %p41
      %p43 = scmp.ne.s32.totalorder %s34, %s35
      %p44 = scmp.eq.s32.totalorder %s29, 0
      %p45 = por %p43, %p44
      %p46 = scmp.ne.s32.totalorder %s34, %s35
      %p47 = scmp.eq.s32.totalorder %s30, 3
      %p48 = por %p46, %p47
      %p50 = scmp.ne.s32.totalorder %s35, %s49
      %p51 = scmp.eq.s32.totalorder %s30, 0
      %p52 = por %p50, %p51
      %s54 = sadd.s32 %s53, 1
      %p57 = scmp.eq.s32.totalorder %s24, 3
      %p58 = scmp.ne.s32.totalorder %s53, %s55
      %p59 = scmp.eq.s32.totalorder %s24, 0
      %p60 = por %p58, %p59
      %p61 = scmp.ne.s32.totalorder %s53, %s55
      %p62 = scmp.eq.s32.totalorder %s29, 3
      %p63 = por %p61, %p62
      %p64 = scmp.ne.s32.totalorder %s55, %s56
      %p65 = scmp.eq.s32.totalorder %s29, 0
      %p66 = por %p64, %p65
      %p67 = scmp.ne.s32.totalorder %s55, %s56
      %p68 = scmp.eq.s32.totalorder %s30, 3
      %p69 = por %p67, %p68
      %p71 = scmp.ne.s32.totalorder %s56, %s70
      %p72 = scmp.eq.s32.totalorder %s30, 0
      %p73 = por %p71, %p72
      %s74 = ssub.s32 %s24, %s31
      %p75 = scmp.eq.s32.totalorder %s74, 0
      %s77 = sadd.s32 %s76, 1
      %s78 = scalar_select %p75, %s76, %s77
      %p81 = pneg %p75
      %p82 = scmp.eq.s32.totalorder %s24, 3
      %p83 = por %p81, %p82
      %p84 = scmp.ne.s32.totalorder %s76, %s79
      %p85 = scmp.eq.s32.totalorder %s24, 0
      %p86 = por %p84, %p85
      %p87 = scmp.ne.s32.totalorder %s76, %s79
      %p88 = scmp.eq.s32.totalorder %s29, 3
      %p89 = por %p87, %p88
      %p90 = scmp.ne.s32.totalorder %s79, %s80
      %p91 = scmp.eq.s32.totalorder %s29, 0
      %p92 = por %p90, %p91
      %p93 = scmp.ne.s32.totalorder %s79, %s80
      %p94 = scmp.eq.s32.totalorder %s30, 3
      %p95 = por %p93, %p94
      %p97 = scmp.ne.s32.totalorder %s80, %s96
      %p98 = scmp.eq.s32.totalorder %s30, 0
      %p99 = por %p97, %p98
      %s101 = sadd.s32 %s100, 1
      %p104 = scmp.eq.s32.totalorder %s24, 3
      %p105 = scmp.ne.s32.totalorder %s100, %s102
      %p106 = scmp.eq.s32.totalorder %s24, 0
      %p107 = por %p105, %p106
      %p108 = scmp.ne.s32.totalorder %s100, %s102
      %p109 = scmp.eq.s32.totalorder %s29, 3
      %p110 = por %p108, %p109
      %p111 = scmp.ne.s32.totalorder %s102, %s103
      %p112 = scmp.eq.s32.totalorder %s29, 0
      %p113 = por %p111, %p112
      %p114 = scmp.ne.s32.totalorder %s102, %s103
      %p115 = scmp.eq.s32.totalorder %s30, 3
      %p116 = por %p114, %p115
      %p118 = scmp.ne.s32.totalorder %s103, %s117
      %p119 = scmp.eq.s32.totalorder %s30, 0
      %p120 = por %p118, %p119
      %s122 = sadd.s32 %s121, 1
      %p125 = scmp.eq.s32.totalorder %s24, 3
      %p126 = scmp.ne.s32.totalorder %s121, %s123
      %p127 = scmp.eq.s32.totalorder %s24, 0
      %p128 = por %p126, %p127
      %p129 = scmp.ne.s32.totalorder %s121, %s123
      %p130 = scmp.eq.s32.totalorder %s29, 3
      %p131 = por %p129, %p130
      %p132 = scmp.ne.s32.totalorder %s123, %s124
      %p133 = scmp.eq.s32.totalorder %s29, 0
      %p134 = por %p132, %p133
      %p135 = scmp.ne.s32.totalorder %s123, %s124
      %p136 = scmp.eq.s32.totalorder %s30, 3
      %p137 = por %p135, %p136
      %p139 = scmp.ne.s32.totalorder %s124, %s138
      %p140 = scmp.eq.s32.totalorder %s30, 0
      %p141 = por %p139, %p140
      %s143 = sadd.s32 %s142, 1
      %p146 = scmp.eq.s32.totalorder %s24, 3
      %p147 = scmp.ne.s32.totalorder %s142, %s144
      %p148 = scmp.eq.s32.totalorder %s24, 0
      %p149 = por %p147, %p148
      %p150 = scmp.ne.s32.totalorder %s142, %s144
      %p151 = scmp.eq.s32.totalorder %s29, 3
      %p152 = por %p150, %p151
      %p153 = scmp.ne.s32.totalorder %s144, %s145
      %p154 = scmp.eq.s32.totalorder %s29, 0
      %p155 = por %p153, %p154
      %p156 = scmp.ne.s32.totalorder %s144, %s145
      %p157 = scmp.eq.s32.totalorder %s30, 3
      %p158 = por %p156, %p157
      %p160 = scmp.ne.s32.totalorder %s145, %s159
      %p161 = scmp.eq.s32.totalorder %s30, 0
      %p162 = por %p160, %p161
      %s164 = sadd.s32 %s163, 1
      %p167 = scmp.eq.s32.totalorder %s24, 3
      %p168 = scmp.ne.s32.totalorder %s163, %s165
      %p169 = scmp.eq.s32.totalorder %s24, 0
      %p170 = por %p168, %p169
      %p171 = scmp.ne.s32.totalorder %s163, %s165
      %p172 = scmp.eq.s32.totalorder %s29, 3
      %p173 = por %p171, %p172
      %p174 = scmp.ne.s32.totalorder %s165, %s166
      %p175 = scmp.eq.s32.totalorder %s29, 0
      %p176 = por %p174, %p175
      %p177 = scmp.ne.s32.totalorder %s165, %s166
      %p178 = scmp.eq.s32.totalorder %s30, 3
      %p179 = por %p177, %p178
      %p181 = scmp.ne.s32.totalorder %s166, %s180
      %p182 = scmp.eq.s32.totalorder %s30, 0
      %p183 = por %p181, %p182
      %s185 = sadd.s32 %s184, 1
      %p188 = scmp.eq.s32.totalorder %s24, 3
      %p189 = scmp.ne.s32.totalorder %s184, %s186
      %p190 = scmp.eq.s32.totalorder %s24, 0
      %p191 = por %p189, %p190
      %p192 = scmp.ne.s32.totalorder %s184, %s186
      %p193 = scmp.eq.s32.totalorder %s29, 3
      %p194 = por %p192, %p193
      %p195 = scmp.ne.s32.totalorder %s186, %s187
      %p196 = scmp.eq.s32.totalorder %s29, 0
      %p197 = por %p195, %p196
      %p198 = scmp.ne.s32.totalorder %s186, %s187
      %p199 = scmp.eq.s32.totalorder %s30, 3
      %p200 = por %p198, %p199
      %p202 = scmp.ne.s32.totalorder %s187, %s201
      %p203 = scmp.eq.s32.totalorder %s30, 0
      %p204 = por %p202, %p203
      %s206 = sadd.s32 %s205, 1
      %p209 = scmp.eq.s32.totalorder %s24, 3
      %p210 = scmp.ne.s32.totalorder %s205, %s207
      %p211 = scmp.eq.s32.totalorder %s24, 0
      %p212 = por %p210, %p211
      %p213 = scmp.ne.s32.totalorder %s205, %s207
      %p214 = scmp.eq.s32.totalorder %s29, 3
      %p215 = por %p213, %p214
      %p216 = scmp.ne.s32.totalorder %s207, %s208
      %p217 = scmp.eq.s32.totalorder %s29, 0
      %p218 = por %p216, %p217
      %p219 = scmp.ne.s32.totalorder %s207, %s208
      %p220 = scmp.eq.s32.totalorder %s30, 3
      %p221 = por %p219, %p220
      %p223 = scmp.ne.s32.totalorder %s208, %s222
      %p224 = scmp.eq.s32.totalorder %s30, 0
      %p225 = por %p223, %p224
      %s227 = sadd.s32 %s226, 1
      %p230 = scmp.eq.s32.totalorder %s24, 3
      %p231 = scmp.ne.s32.totalorder %s226, %s228
      %p232 = scmp.eq.s32.totalorder %s24, 0
      %p233 = por %p231, %p232
      %p234 = scmp.ne.s32.totalorder %s226, %s228
      %p235 = scmp.eq.s32.totalorder %s29, 3
      %p236 = por %p234, %p235
      %p237 = scmp.ne.s32.totalorder %s228, %s229
      %p238 = scmp.eq.s32.totalorder %s29, 0
      %p239 = por %p237, %p238
      %p240 = scmp.ne.s32.totalorder %s228, %s229
      %p241 = scmp.eq.s32.totalorder %s30, 3
      %p242 = por %p240, %p241
      %p244 = scmp.ne.s32.totalorder %s229, %s243
      %p245 = scmp.eq.s32.totalorder %s30, 0
      %p246 = por %p244, %p245
      %s247 = ssub.s32 %s24, %s31
      %p248 = scmp.eq.s32.totalorder %s247, 0
      %s250 = sadd.s32 %s249, 1
      %s251 = scalar_select %p248, %s249, %s250
      %p254 = pneg %p248
      %p255 = scmp.eq.s32.totalorder %s24, 3
      %p256 = por %p254, %p255
      %p257 = scmp.ne.s32.totalorder %s249, %s252
      %p258 = scmp.eq.s32.totalorder %s24, 0
      %p259 = por %p257, %p258
      %p260 = scmp.ne.s32.totalorder %s249, %s252
      %p261 = scmp.eq.s32.totalorder %s29, 3
      %p262 = por %p260, %p261
      %p263 = scmp.ne.s32.totalorder %s252, %s253
      %p264 = scmp.eq.s32.totalorder %s29, 0
      %p265 = por %p263, %p264
      %p266 = scmp.ne.s32.totalorder %s252, %s253
      %p267 = scmp.eq.s32.totalorder %s30, 3
      %p268 = por %p266, %p267
      %p270 = scmp.ne.s32.totalorder %s253, %s269
      %p271 = scmp.eq.s32.totalorder %s30, 0
      %p272 = por %p270, %p271
      %p273 = scmp.le.s32.totalorder 1, %s24
      %p274 = scmp.lt.s32.totalorder %s24, 5
      %p275 = pnand %p273, %p274
      %p276 = pneg %p275
      // Predicated region
      $region9: #{tpu_custom_call.1} parent=5 // pred_check
        _
      $region10: #{tpu_custom_call.1} parent=5 // pred_check_branch
        %278 = sbr.rel (%p275) target = $region12
      $region11: #{tpu_custom_call.1} parent=5 // pred_region
        %s279 = ssub.s32 %s24, 1
        // Predicated region
        $region13: #{tpu_custom_call.1} parent=11 // pred_check
          %p280 = pneg %p45
        $region14: #{tpu_custom_call.1} parent=11 // pred_check_branch
          %282 = sbr.rel (%p280) target = $region16
        $region15: #{tpu_custom_call.1} parent=11 // pred_region
          %284 = vsyncadd [#allocation5], 0
          %s286 = sshll.u32 %s0, 4
          %s287 = int_to_ptr.vmem [resolvable:$true] %s286
          %289 = dma.vmem_to_smem %s287, 16, [#allocation2], [#allocation5]
        $region16: #{tpu_custom_call.1} parent=11 // pred_fallthru
          _
        // Predicated region
        $region17: #{tpu_custom_call.1} parent=11 // pred_check
          %p290 = pneg %p66
        $region18: #{tpu_custom_call.1} parent=11 // pred_check_branch
          %292 = sbr.rel (%p290) target = $region20
        $region19: #{tpu_custom_call.1} parent=11 // pred_region
          %294 = vsyncadd [#allocation7], 0
          %s296 = sshll.u32 %s1, 4
          %s297 = int_to_ptr.vmem [resolvable:$true] %s296
          %299 = dma.vmem_to_smem %s297, 16, [#allocation6], [#allocation7]
        $region20: #{tpu_custom_call.1} parent=11 // pred_fallthru
          _
        // Predicated region
        $region21: #{tpu_custom_call.1} parent=11 // pred_check
          %p300 = pneg %p113
        $region22: #{tpu_custom_call.1} parent=11 // pred_check_branch
          %302 = sbr.rel (%p300) target = $region24
        $region23: #{tpu_custom_call.1} parent=11 // pred_region
          _
        $region24: #{tpu_custom_call.1} parent=11 // pred_fallthru
          _
        // Predicated region
        $region25: #{tpu_custom_call.1} parent=11 // pred_check
          %p303 = pneg %p134
        $region26: #{tpu_custom_call.1} parent=11 // pred_check_branch
          %305 = sbr.rel (%p303) target = $region28
        $region27: #{tpu_custom_call.1} parent=11 // pred_region
          _
        $region28: #{tpu_custom_call.1} parent=11 // pred_fallthru
          _
        // Predicated region
        $region29: #{tpu_custom_call.1} parent=11 // pred_check
          %p306 = pneg %p155
        $region30: #{tpu_custom_call.1} parent=11 // pred_check_branch
          %308 = sbr.rel (%p306) target = $region32
        $region31: #{tpu_custom_call.1} parent=11 // pred_region
          _
        $region32: #{tpu_custom_call.1} parent=11 // pred_fallthru
          _
        // Predicated region
        $region33: #{tpu_custom_call.1} parent=11 // pred_check
          %p309 = pneg %p176
        $region34: #{tpu_custom_call.1} parent=11 // pred_check_branch
          %311 = sbr.rel (%p309) target = $region36
        $region35: #{tpu_custom_call.1} parent=11 // pred_region
          _
        $region36: #{tpu_custom_call.1} parent=11 // pred_fallthru
          _
        // Predicated region
        $region37: #{tpu_custom_call.1} parent=11 // pred_check
          %p312 = pneg %p197
        $region38: #{tpu_custom_call.1} parent=11 // pred_check_branch
          %314 = sbr.rel (%p312) target = $region40
        $region39: #{tpu_custom_call.1} parent=11 // pred_region
          _
        $region40: #{tpu_custom_call.1} parent=11 // pred_fallthru
          _
        // Predicated region
        $region41: #{tpu_custom_call.1} parent=11 // pred_check
          %p315 = pneg %p218
        $region42: #{tpu_custom_call.1} parent=11 // pred_check_branch
          %317 = sbr.rel (%p315) target = $region44
        $region43: #{tpu_custom_call.1} parent=11 // pred_region
          _
        $region44: #{tpu_custom_call.1} parent=11 // pred_fallthru
          _
        // Predicated region
        $region45: #{tpu_custom_call.1} parent=11 // pred_check
          %p318 = pneg %p239
        $region46: #{tpu_custom_call.1} parent=11 // pred_check_branch
          %320 = sbr.rel (%p318) target = $region48
        $region47: #{tpu_custom_call.1} parent=11 // pred_region
          _
        $region48: #{tpu_custom_call.1} parent=11 // pred_fallthru
          _
      $region12: #{tpu_custom_call.1} parent=5 // pred_fallthru
        _
      %p321 = scmp.lt.s32.totalorder %s24, 4
      // Predicated region
      $region49: #{tpu_custom_call.1} parent=5 // pred_check
        %p322 = pneg %p321
      $region50: #{tpu_custom_call.1} parent=5 // pred_check_branch
        %324 = sbr.rel (%p322) target = $region52
      $region51: #{tpu_custom_call.1} parent=5 // pred_region
        // Predicated region
        $region53: #{tpu_custom_call.1} parent=51 // pred_check
          %p325 = pneg %p86
        $region54: #{tpu_custom_call.1} parent=51 // pred_check_branch
          %327 = sbr.rel (%p325) target = $region56
        $region55: #{tpu_custom_call.1} parent=51 // pred_region
          #allocation11 [shape = 'u32[6]{0}', space=smem, size = 0x18, scoped, tag = 'DMA stride descriptor']
          %s328 = sand.u32 %s76, 1
          %s329 = scalar_lea.sflag [#allocation3], %s328
          %s330 = sand.u32 %s76, 1
          %s331 = smul.addr %s330, 80
          %s332 = scalar_lea.vmem [#allocation8], %s331
          %334 = vsyncadd %s329, 0
          %s335 = smul.addr %s24, 2
          %s336 = smul.addr %s335, 8
          %s337 = scalar_lea.hbm %s2, %s336
          %s339 = sshll.u32 1, 14
          %s340 = sxor.u32 4294967295, %s339
          %s342 = sld [smem:[#allocation0]]
          %s343 = sadd.s32 2, %s342
          %s345 = sshll.u32 7, 26
          %s346 = sxor.u32 4294967295, %s345
          %s347 = sand.u32 0, %s346
          %s348 = sshll.u32 %s343, 26
          %s349 = sor.u32 %s347, %s348
          %s350 = sshll.u32 %s337, 4
          %s351 = int_to_ptr.hbm [resolvable:$true] %s350
          %s352 = sshll.u32 %s332, 4
          %s353 = int_to_ptr.vmem [resolvable:$true] %s352
          %359 = sst [smem:[#allocation11]] 1024
          %s360 = scalar_lea.smem [#allocation11], 1
          %361 = sst [smem:[%s360]] 256
          %s362 = scalar_lea.smem [#allocation11], 2
          %363 = sst [smem:[%s362]] 2
          %s364 = scalar_lea.smem [#allocation11], 3
          %365 = sst [smem:[%s364]] 128
          %s366 = scalar_lea.smem [#allocation11], 4
          %367 = sst [smem:[%s366]] 128
          %s368 = scalar_lea.smem [#allocation11], 5
          %369 = sst [smem:[%s368]] 8
          %371 = dma.general %s351, 1280, %s353, %s329, [#allocation10], [#allocation11], %s349, 0
        $region56: #{tpu_custom_call.1} parent=51 // pred_fallthru
          _
      $region52: #{tpu_custom_call.1} parent=5 // pred_fallthru
        _
      %p372 = scmp.le.s32.totalorder 1, %s24
      %p373 = scmp.lt.s32.totalorder %s24, 5
      %p374 = pnand %p372, %p373
      %p375 = pneg %p374
      // Predicated region
      $region57: #{tpu_custom_call.1} parent=5 // pred_check
        _
      $region58: #{tpu_custom_call.1} parent=5 // pred_check_branch
        %377 = sbr.rel (%p374) target = $region60
      $region59: #{tpu_custom_call.1} parent=5 // pred_region
        %s378 = ssub.s32 %s24, 1
        // Predicated region
        $region61: #{tpu_custom_call.1} parent=59 // pred_check
          %p379 = pneg %p45
        $region62: #{tpu_custom_call.1} parent=59 // pred_check_branch
          %381 = sbr.rel (%p379) target = $region64
        $region63: #{tpu_custom_call.1} parent=59 // pred_region
          %383 = dma.done [#allocation5], 16
        $region64: #{tpu_custom_call.1} parent=59 // pred_fallthru
          _
        // Predicated region
        $region65: #{tpu_custom_call.1} parent=59 // pred_check
          %p384 = pneg %p66
        $region66: #{tpu_custom_call.1} parent=59 // pred_check_branch
          %386 = sbr.rel (%p384) target = $region68
        $region67: #{tpu_custom_call.1} parent=59 // pred_region
          %388 = dma.done [#allocation7], 16
        $region68: #{tpu_custom_call.1} parent=59 // pred_fallthru
          _
        %s389 = sand.u32 %s79, 1
        %s390 = scalar_lea.sflag [#allocation3], %s389
        %s391 = sand.u32 %s79, 1
        %s392 = smul.addr %s391, 80
        %s393 = scalar_lea.vmem [#allocation8], %s392
        // Predicated region
        $region69: #{tpu_custom_call.1} parent=59 // pred_check
          %p394 = pneg %p92
        $region70: #{tpu_custom_call.1} parent=59 // pred_check_branch
          %396 = sbr.rel (%p394) target = $region72
        $region71: #{tpu_custom_call.1} parent=59 // pred_region
          %398 = dma.done %s390, 1280
        $region72: #{tpu_custom_call.1} parent=59 // pred_fallthru
          _
        %399 = sfence
        %p400 = pneg %p45
        %p401 = pneg %p42
        %p402 = pneg %p66
        %p403 = pneg %p63
        %s404 = sand.u32 %s79, 1
        %s405 = scalar_lea.sflag [#allocation3], %s404
        %s406 = sand.u32 %s79, 1
        %s407 = smul.addr %s406, 80
        %s408 = scalar_lea.vmem [#allocation8], %s407
        %p409 = pneg %p92
        %p410 = pneg %p89
        %p411 = pneg %p113
        %p412 = pneg %p110
        %p413 = pneg %p134
        %p414 = pneg %p131
        %p415 = pneg %p155
        %p416 = pneg %p152
        %p417 = pneg %p176
        %p418 = pneg %p173
        %p419 = pneg %p197
        %p420 = pneg %p194
        %p421 = pneg %p218
        %p422 = pneg %p215
        %p423 = pneg %p239
        %p424 = pneg %p236
        %p425 = pneg %p265
        %p426 = pneg %p262
        %s427 = sand.u32 %s252, 1
        %s428 = scalar_lea.sflag [#allocation4], %s427
        %s429 = sand.u32 %s252, 1
        %s430 = scalar_lea.vmem [#allocation9], %s429
        %v431 = vld [vmem:[%s393] sm:$0xff]
        %v432 = vld [vmem:[%s393 + $0x8] sm:$0xff]
        %s433 = sld [smem:[#allocation2]]
        %v434 = vstv %s433
        %v435 = vmul.f32 %v431, %v434
        %v436 = vmul.f32 %v432, %v434
        %s437 = sld [smem:[#allocation6]]
        %v438 = vstv %s437
        %v439 = vmul.f32 %v431, %v438
        %v440 = vmul.f32 %v432, %v438
        %s441 = scalar_lea.vmem %s393, 16 [#allocation8]
        %v442 = vld [vmem:[%s441] sm:$0xff]
        %v443 = vld [vmem:[%s441 + $0x8] sm:$0xff]
        %s444 = sld [smem:[#allocation2 + $0x1]]
        %v445 = vstv %s444
        %v446 = vmul.f32 %v442, %v445
        %v447 = vmul.f32 %v443, %v445
        %v448 = vadd.f32 %v435, %v446
        %v449 = vadd.f32 %v436, %v447
        %s450 = sld [smem:[#allocation6 + $0x1]]
        %v451 = vstv %s450
        %v452 = vmul.f32 %v442, %v451
        %v453 = vmul.f32 %v443, %v451
        %v454 = vadd.f32 %v439, %v452
        %v455 = vadd.f32 %v440, %v453
        %s456 = scalar_lea.vmem %s393, 32 [#allocation8]
        %v457 = vld [vmem:[%s456] sm:$0xff]
        %v458 = vld [vmem:[%s456 + $0x8] sm:$0xff]
        %s459 = sld [smem:[#allocation2 + $0x2]]
        %v460 = vstv %s459
        %v461 = vmul.f32 %v457, %v460
        %v462 = vmul.f32 %v458, %v460
        %v463 = vadd.f32 %v448, %v461
        %v464 = vadd.f32 %v449, %v462
        %s465 = sld [smem:[#allocation6 + $0x2]]
        %v466 = vstv %s465
        %v467 = vmul.f32 %v457, %v466
        %v468 = vmul.f32 %v458, %v466
        %v469 = vadd.f32 %v454, %v467
        %v470 = vadd.f32 %v455, %v468
        %s471 = scalar_lea.vmem %s393, 48 [#allocation8]
        %v472 = vld [vmem:[%s471] sm:$0xff]
        %v473 = vld [vmem:[%s471 + $0x8] sm:$0xff]
        %s474 = sld [smem:[#allocation2 + $0x3]]
        %v475 = vstv %s474
        %v476 = vmul.f32 %v472, %v475
        %v477 = vmul.f32 %v473, %v475
        %v478 = vadd.f32 %v463, %v476
        %v479 = vadd.f32 %v464, %v477
        %s480 = sld [smem:[#allocation6 + $0x3]]
        %v481 = vstv %s480
        %v482 = vmul.f32 %v472, %v481
        %v483 = vmul.f32 %v473, %v481
        %v484 = vadd.f32 %v469, %v482
        %v485 = vadd.f32 %v470, %v483
        %s486 = scalar_lea.vmem %s393, 64 [#allocation8]
        %v487 = vld [vmem:[%s486] sm:$0xff]
        %v488 = vld [vmem:[%s486 + $0x8] sm:$0xff]
        %s489 = sld [smem:[#allocation2 + $0x4]]
        %v490 = vstv %s489
        %v491 = vmul.f32 %v487, %v490
        %v492 = vmul.f32 %v488, %v490
        %v493 = vadd.f32 %v478, %v491
        %v494 = vadd.f32 %v479, %v492
        %s495 = sld [smem:[#allocation6 + $0x4]]
        %v496 = vstv %s495
        %v497 = vmul.f32 %v487, %v496
        %v498 = vmul.f32 %v488, %v496
        %v499 = vadd.f32 %v484, %v497
        %v500 = vadd.f32 %v485, %v498
        %v501 = vld [vmem:[%s5] sm:$0xff]
        %v502 = vld [vmem:[%s5 + $0x8] sm:$0xff]
        %v503 = vld [vmem:[%s5 + $0x10] sm:$0xff]
        %v504 = vld [vmem:[%s5 + $0x18] sm:$0xff]
        %v505 = vld [vmem:[%s5 + $0x20] sm:$0xff]
        %v506 = vld [vmem:[%s5 + $0x28] sm:$0xff]
        %v507 = vld [vmem:[%s5 + $0x30] sm:$0xff]
        %v508 = vld [vmem:[%s5 + $0x38] sm:$0xff]
        %v509 = vld [vmem:[%s6] sm:$0x1]
        %v511 = vperm.slane %v509, 0
        %vm513 = vcmask 523264
        %v515 = vsel %vm513, %v493, 0
        %v518 = vsel %vm513, %v494, 0
        %520 = vmatpush.msra.mxu0 0.0
        %521 = vmatpush.msra.mxu0 0.0
        %522 = vmatpush.msra.mxu0 0.0
        %523 = vmatpush.msra.mxu0 0.0
        %524 = vmatpush.msra.mxu0 0.0
        %525 = vmatpush.msra.mxu0 0.0
        %526 = vmatpush.msra.mxu0 0.0
        %527 = vmatpush.msra.mxu0 0.0
        %528 = vmatpush.msra.mxu0 %v508
        %529 = vmatpush.msra.mxu0 %v507
        %530 = vmatpush.msra.mxu0 %v506
        %531 = vmatpush.msra.mxu0 %v505
        %532 = vmatpush.msra.mxu0 %v504
        %533 = vmatpush.msra.mxu0 %v503
        %534 = vmatpush.msra.mxu0 %v502
        %535 = vmatpush.msra.mxu0 %v501
        %536 = vmatmul.f32.gmra.mxu0 %v515
        %v537 = vpop.f32.mrf.mxu0
        %v538 = vadd.f32 %v511, %v537
        %539 = vmatmul.f32.gmra.mxu0 %v518
        %v540 = vpop.f32.mrf.mxu0
        %v541 = vadd.f32 %v511, %v540
        %542 = vdwg.mxu0
        %v543 = vld [vmem:[%s3] sm:$0xff]
        %v544 = vld [vmem:[%s3 + $0x8] sm:$0xff]
        %v545 = vld [vmem:[%s3 + $0x10] sm:$0xff]
        %v546 = vld [vmem:[%s3 + $0x18] sm:$0xff]
        %v547 = vld [vmem:[%s3 + $0x20] sm:$0xff]
        %v548 = vld [vmem:[%s3 + $0x28] sm:$0xff]
        %v549 = vld [vmem:[%s3 + $0x30] sm:$0xff]
        %v550 = vld [vmem:[%s3 + $0x38] sm:$0xff]
        %v551 = vld [vmem:[%s4] sm:$0x1]
        %v553 = vperm.slane %v551, 0
        %v556 = vsel %vm513, %v499, 0
        %v559 = vsel %vm513, %v500, 0
        %561 = vmatpush.msra.mxu0 0.0
        %562 = vmatpush.msra.mxu0 0.0
        %563 = vmatpush.msra.mxu0 0.0
        %564 = vmatpush.msra.mxu0 0.0
        %565 = vmatpush.msra.mxu0 0.0
        %566 = vmatpush.msra.mxu0 0.0
        %567 = vmatpush.msra.mxu0 0.0
        %568 = vmatpush.msra.mxu0 0.0
        %569 = vmatpush.msra.mxu0 %v550
        %570 = vmatpush.msra.mxu0 %v549
        %571 = vmatpush.msra.mxu0 %v548
        %572 = vmatpush.msra.mxu0 %v547
        %573 = vmatpush.msra.mxu0 %v546
        %574 = vmatpush.msra.mxu0 %v545
        %575 = vmatpush.msra.mxu0 %v544
        %576 = vmatpush.msra.mxu0 %v543
        %577 = vmatmul.f32.gmra.mxu0 %v556
        %v578 = vpop.f32.mrf.mxu0
        %v579 = vadd.f32 %v553, %v578
        %580 = vmatmul.f32.gmra.mxu0 %v559
        %v581 = vpop.f32.mrf.mxu0
        %v582 = vadd.f32 %v553, %v581
        %583 = vdwg.mxu0
        %vm584 = vcmask 31744
        %v585 = vsel %vm584, %v538, -inf
        %v586 = vsel %vm584, %v541, -inf
        %v587 = vmax.f32 %v585, %v586
        %v588 = vrot.slane %v587, 4
        %v589 = vmax.f32 %v587, %v588
        %v590 = vrot.slane %v589, 2
        %v591 = vmax.f32 %v589, %v590
        %v592 = vrot.slane %v591, 1
        %v593 = vmax.f32 %v591, %v592
        %v594 = vsub.f32 %v538, %v593
        %v595 = vsub.f32 %v541, %v593
        %v596 = vmul.f32 %v594, 1.442695
        %v597 = vpow.pop %v596
        %v598 = vmul.f32 %v595, 1.442695
        %v599 = vpow.pop %v598
        %v600 = vsel %vm584, %v597, 0.0
        %v601 = vsel %vm584, %v599, 0.0
        %v602 = vadd.f32 %v600, %v601
        %v603 = vrot.slane %v602, 4
        %v604 = vadd.f32 %v602, %v603
        %v605 = vrot.slane %v604, 2
        %v606 = vadd.f32 %v604, %v605
        %v607 = vrot.slane %v606, 1
        %v608 = vadd.f32 %v606, %v607
        %v609 = vrcp.pop %v608
        %v610 = vmul.f32 %v597, %v609
        %v611 = vmul.f32 %v599, %v609
        %612 = vxpose.xlu0.b32.start [1/16] %v610, 128
        %613 = vxpose.xlu0.b32.cont [2/16] %v611, 128
        %614 = vxpose.xlu0.b32.cont [3/16] 0.0, 128
        %615 = vxpose.xlu0.b32.cont [4/16] 0.0, 128
        %616 = vxpose.xlu0.b32.cont [5/16] 0.0, 128
        %617 = vxpose.xlu0.b32.cont [6/16] 0.0, 128
        %618 = vxpose.xlu0.b32.cont [7/16] 0.0, 128
        %619 = vxpose.xlu0.b32.cont [8/16] 0.0, 128
        %620 = vxpose.xlu0.b32.cont [9/16] 0.0, 128
        %621 = vxpose.xlu0.b32.cont [10/16] 0.0, 128
        %622 = vxpose.xlu0.b32.cont [11/16] 0.0, 128
        %623 = vxpose.xlu0.b32.cont [12/16] 0.0, 128
        %624 = vxpose.xlu0.b32.cont [13/16] 0.0, 128
        %625 = vxpose.xlu0.b32.cont [14/16] 0.0, 128
        %626 = vxpose.xlu0.b32.cont [15/16] 0.0, 128
        %627 = vxpose.xlu0.b32.end [16/16] 0.0, 128
        %v628 = vpop.trf.xlu0
        %v629 = vpop.trf.xlu0
        %v630 = vpop.trf.xlu0
        %v631 = vpop.trf.xlu0
        %v632 = vpop.trf.xlu0
        %v633 = vpop.trf.xlu0
        %v634 = vpop.trf.xlu0
        %v635 = vpop.trf.xlu0
        %v636 = vpop.trf.xlu0
        %v637 = vpop.trf.xlu0
        %v638 = vpop.trf.xlu0
        %v639 = vpop.trf.xlu0
        %v640 = vpop.trf.xlu0
        %v641 = vpop.trf.xlu0
        %v642 = vpop.trf.xlu0
        %v643 = vpop.trf.xlu0
        %vm644 = vcmask 130048
        %v646 = vsel %vm644, %v628, 0
        %648 = vmatpush.msra.mxu0 0.0
        %649 = vmatpush.msra.mxu0 0.0
        %650 = vmatpush.msra.mxu0 0.0
        %651 = vmatpush.msra.mxu0 0.0
        %652 = vmatpush.msra.mxu0 0.0
        %653 = vmatpush.msra.mxu0 0.0
        %654 = vmatpush.msra.mxu0 0.0
        %655 = vmatpush.msra.mxu0 0.0
        %656 = vmatpush.msra.mxu0 0.0
        %657 = vmatpush.msra.mxu0 0.0
        %658 = vmatpush.msra.mxu0 0.0
        %659 = vmatpush.msra.mxu0 0.0
        %660 = vmatpush.msra.mxu0 0.0
        %661 = vmatpush.msra.mxu0 0.0
        %662 = vmatpush.msra.mxu0 %v582
        %663 = vmatpush.msra.mxu0 %v579
        %664 = vmatmul.f32.gmra.mxu0 %v646
        %v665 = vpop.f32.mrf.mxu0
        %v666 = vadd.f32 0.0, %v665
        %667 = vdwg.mxu0
        %v669 = vunpack.c.l.s4 1983009808
        %v670 = vunpack.c.0.s8 %v669
        %v671 = vperm.slane %v666, %v670
        %v672 = vrot.slane %v671, 4
        %vm673 = vcmask 1047556
        %v674 = vsel %vm673, 0.0, %v672
        %v676 = vunpack.c.l.s4 1934713408
        %v677 = vunpack.c.0.s8 %v676
        %v678 = vperm.slane %v671, %v677
        %v680 = vunpack.c.l.s4 1934713408
        %v681 = vunpack.c.0.s8 %v680
        %v682 = vperm.slane %v674, %v681
        %v683 = vrot.slane %v678, 4
        %v684 = vsel %vm673, 0.0, %v683
        %v685 = vrot.slane %v682, 4
        %v686 = vsel %vm673, 0.0, %v685
        %688 = vrot.lane.b32.xlu0 %v684, 32
        %v689 = vpop.permute.xlu0 %688
        %692 = vrot.lane.b32.xlu0 %v682, 64
        %v693 = vpop.permute.xlu0 %692
        %696 = vrot.lane.b32.xlu0 %v686, 96
        %v697 = vpop.permute.xlu0 %696
        %vm699 = vcmask 261120
        %v700 = vsel %vm699, %v678, %v689
        %v701 = vsel %vm513, %v700, %v693
        %vm702 = vcmask 785408
        %v703 = vsel %vm702, %v701, %v697
        %v704 = vld [vmem:[%s7] sm:$0xff]
        %v705 = vld [vmem:[%s7 + $0x8] sm:$0xff]
        %v706 = vld [vmem:[%s7 + $0x10] sm:$0xff]
        %v707 = vld [vmem:[%s7 + $0x18] sm:$0xff]
        %v708 = vld [vmem:[%s7 + $0x20] sm:$0xff]
        %v709 = vld [vmem:[%s7 + $0x28] sm:$0xff]
        %v710 = vld [vmem:[%s7 + $0x30] sm:$0xff]
        %v711 = vld [vmem:[%s7 + $0x38] sm:$0xff]
        %v712 = vld [vmem:[%s7 + $0x40] sm:$0xff]
        %v713 = vld [vmem:[%s7 + $0x48] sm:$0xff]
        %v714 = vld [vmem:[%s7 + $0x50] sm:$0xff]
        %v715 = vld [vmem:[%s7 + $0x58] sm:$0xff]
        %v716 = vld [vmem:[%s7 + $0x60] sm:$0xff]
        %v717 = vld [vmem:[%s7 + $0x68] sm:$0xff]
        %v718 = vld [vmem:[%s7 + $0x70] sm:$0xff]
        %v719 = vld [vmem:[%s7 + $0x78] sm:$0xff]
        %v720 = vld [vmem:[%s8] sm:$0x1]
        %721 = vmatpush.msra.mxu0 %v719
        %722 = vmatpush.msra.mxu0 %v718
        %723 = vmatpush.msra.mxu0 %v717
        %724 = vmatpush.msra.mxu0 %v716
        %725 = vmatpush.msra.mxu0 %v715
        %726 = vmatpush.msra.mxu0 %v714
        %727 = vmatpush.msra.mxu0 %v713
        %728 = vmatpush.msra.mxu0 %v712
        %729 = vmatpush.msra.mxu0 %v711
        %730 = vmatpush.msra.mxu0 %v710
        %731 = vmatpush.msra.mxu0 %v709
        %732 = vmatpush.msra.mxu0 %v708
        %733 = vmatpush.msra.mxu0 %v707
        %734 = vmatpush.msra.mxu0 %v706
        %735 = vmatpush.msra.mxu0 %v705
        %736 = vmatpush.msra.mxu0 %v704
        %737 = vmatmul.f32.gmra.mxu0 %v703
        %v738 = vpop.f32.mrf.mxu0
        %v739 = vadd.f32 %v720, %v738
        %740 = vdwg.mxu0
        %v741 = vmul.f32 %v739, %v739
        %vm742 = vcmask 516096
        %v743 = vsel %vm742, %v741, 0.0
        %744 = vadd.xlane.f32.xlu0 %v743
        %v745 = vpop.xlane.xlu0 %744
        %v746 = vmax.f32 %v745, 1e-24
        %v747 = vrsqrt.pop %v746
        %v748 = vmul.f32 %v747, %v746
        %v749 = vmul.f32 %v748, %v747
        %v750 = vmul.f32 0.5, %v749
        %v751 = vsub.f32 1.5, %v750
        %v752 = vmul.f32 %v747, %v751
        %vm753 = vweird.f32 %v746
        %vm754 = vweird.f32 %v747
        %vm755 = vmor %vm753, %vm754
        %v756 = vsel %vm755, %v747, %v752
        %v757 = vmul.f32 %v739, %v756
        %v758 = vld [vmem:[%s9] sm:$0xff]
        %v759 = vld [vmem:[%s9 + $0x8] sm:$0xff]
        %v760 = vld [vmem:[%s9 + $0x10] sm:$0xff]
        %v761 = vld [vmem:[%s9 + $0x18] sm:$0xff]
        %v762 = vld [vmem:[%s9 + $0x20] sm:$0xff]
        %v763 = vld [vmem:[%s9 + $0x28] sm:$0xff]
        %v764 = vld [vmem:[%s9 + $0x30] sm:$0xff]
        %v765 = vld [vmem:[%s9 + $0x38] sm:$0xff]
        %v767 = vsel %vm513, %v757, 0
        %769 = vmatpush.msra.mxu0 0.0
        %770 = vmatpush.msra.mxu0 0.0
        %771 = vmatpush.msra.mxu0 0.0
        %772 = vmatpush.msra.mxu0 0.0
        %773 = vmatpush.msra.mxu0 0.0
        %774 = vmatpush.msra.mxu0 0.0
        %775 = vmatpush.msra.mxu0 0.0
        %776 = vmatpush.msra.mxu0 0.0
        %777 = vmatpush.msra.mxu0 %v765
        %778 = vmatpush.msra.mxu0 %v764
        %779 = vmatpush.msra.mxu0 %v763
        %780 = vmatpush.msra.mxu0 %v762
        %781 = vmatpush.msra.mxu0 %v761
        %782 = vmatpush.msra.mxu0 %v760
        %783 = vmatpush.msra.mxu0 %v759
        %784 = vmatpush.msra.mxu0 %v758
        %785 = vmatmul.f32.gmra.mxu0 %v767
        %v786 = vpop.f32.mrf.mxu0
        %v787 = vadd.f32 0.0, %v786
        %788 = vdwg.mxu0
        %789 = vst [vmem:[%s430] sm:$0x1] %v787
        %s790 = sand.u32 %s252, 1
        %s791 = scalar_lea.sflag [#allocation4], %s790
        %s792 = sand.u32 %s252, 1
        %s793 = scalar_lea.vmem [#allocation9], %s792
        // Predicated region
        $region73: #{tpu_custom_call.1} parent=59 // pred_check
          %p794 = pneg %p262
        $region74: #{tpu_custom_call.1} parent=59 // pred_check_branch
          %796 = sbr.rel (%p794) target = $region76
        $region75: #{tpu_custom_call.1} parent=59 // pred_region
          %798 = vsyncadd %s791, 0
          %s799 = scalar_lea.hbm %s10, %s29
          %s801 = sshll.u32 %s793, 4
          %s802 = int_to_ptr.vmem [resolvable:$true] %s801
          %s803 = sshll.u32 %s799, 4
          %s804 = int_to_ptr.hbm [resolvable:$true] %s803
          %806 = dma.vmem_to_hbm [thread:$0]  %s802, 16, %s804, %s791
        $region76: #{tpu_custom_call.1} parent=59 // pred_fallthru
          _
      $region60: #{tpu_custom_call.1} parent=5 // pred_fallthru
        _
      %p807 = scmp.le.s32.totalorder 2, %s24
      // Predicated region
      $region77: #{tpu_custom_call.1} parent=5 // pred_check
        %p808 = pneg %p807
      $region78: #{tpu_custom_call.1} parent=5 // pred_check_branch
        %810 = sbr.rel (%p808) target = $region80
      $region79: #{tpu_custom_call.1} parent=5 // pred_region
        %s811 = ssub.s32 %s24, 2
        // Predicated region
        $region81: #{tpu_custom_call.1} parent=79 // pred_check
          %p812 = pneg %p268
        $region82: #{tpu_custom_call.1} parent=79 // pred_check_branch
          %814 = sbr.rel (%p812) target = $region84
        $region83: #{tpu_custom_call.1} parent=79 // pred_region
          %s815 = sand.u32 %s253, 1
          %s816 = scalar_lea.sflag [#allocation4], %s815
          %s817 = sand.u32 %s253, 1
          %s818 = scalar_lea.vmem [#allocation9], %s817
          %820 = dma.done %s816, 16
        $region84: #{tpu_custom_call.1} parent=79 // pred_fallthru
          _
      $region80: #{tpu_custom_call.1} parent=5 // pred_fallthru
        _
    $region6: #{tpu_custom_call.1} parent=1 // loop_footer
      %s28 = sadd.s32 1, %s24
    $region7: #{tpu_custom_call.1} parent=1 // loop_footer_branch
      %23 = sbr.rel target = $region3
    $region8: #{tpu_custom_call.1} parent=1 // loop_exit
      _
    %821 = vsyncpa [#allocation3], 1
    %s822 = scalar_lea.sflag [#allocation3], 1
    %823 = vsyncpa %s822, 1
    %824 = vsyncpa [#allocation4], 1
    %s825 = scalar_lea.sflag [#allocation4], 1
    %826 = vsyncpa %s825, 1
    %827 = vsyncpa [#allocation5], 1
    %s828 = scalar_lea.sflag [#allocation5], 1
    %829 = vsyncpa %s828, 1
    %830 = vsyncpa [#allocation7], 1

</llo_original>
